<compile_context>
chip_gen: v7x
topology: tpu7x:2x2x1
jax: 0.10.0
libtpu: 0.0.40
codegen_flags: <defaults>
</compile_context>

<pallas_src>
import functools

import jax
import jax.numpy as jnp
from jax.experimental import pallas as pl
from jax.experimental.pallas import tpu as pltpu


def _round_up(x, m):
    return ((x + m - 1) // m) * m


# ----------------------------------------------------------------------------
# Kernel 1: tiled scatter-mean (segment mean) with in-kernel one-hot.
#   grid = (M_tiles, N_tiles)   -- N (reduction) axis last, "arbitrary"
#   seg_ref   : [1, tn]  int32 segment ids of this N tile (padded with -1)
#   feats_ref : [tn, C+1] float32 features with a trailing ones column
#   out_ref   : [tm, C+1] segment means (count column divides to 1/0)
#   acc_ref   : VMEM [tm, C+1] f32 accumulator (sums + counts)
# ----------------------------------------------------------------------------
def _scatter_mean_kernel(seg_ref, feats_ref, out_ref, acc_ref, *, tm):
    i = pl.program_id(0)  # segment tile (parallel)
    j = pl.program_id(1)  # reduction over N tiles (arbitrary, last)

    @pl.when(j == 0)
    def _():
        acc_ref[...] = jnp.zeros_like(acc_ref)

    seg = seg_ref[...]                                              # [1, tn]
    row = jax.lax.broadcasted_iota(jnp.int32, (tm, seg.shape[1]), 0) + i * tm
    oh = (row == seg).astype(jnp.float32)                           # [tm, tn]
    acc_ref[...] += jnp.dot(oh, feats_ref[...],
                            preferred_element_type=jnp.float32)

    @pl.when(j == pl.num_programs(1) - 1)
    def _():
        a = acc_ref[...]
        cnt = a[:, -1:]                                             # counts
        out_ref[...] = a / jnp.maximum(cnt, 1.0)


def scatter_mean(feats, seg_ids, num_segments, *, tm=128, tn=512):
    """torch_scatter.scatter_mean(feats, seg_ids, dim=0) equivalent."""
    n, c = feats.shape
    fa = jnp.concatenate(
        [feats.astype(jnp.float32), jnp.ones((n, 1), jnp.float32)], axis=1)
    c1 = c + 1

    tm = min(tm, _round_up(num_segments, 8))
    tn = min(tn, _round_up(n, 128))
    m_pad = _round_up(num_segments, tm)
    n_pad = _round_up(n, tn)

    fa = jnp.pad(fa, ((0, n_pad - n), (0, 0)))
    seg = jnp.pad(seg_ids.astype(jnp.int32), (0, n_pad - n),
                  constant_values=-1).reshape(1, n_pad)

    out = pl.pallas_call(
        functools.partial(_scatter_mean_kernel, tm=tm),
        out_shape=jax.ShapeDtypeStruct((m_pad, c1), jnp.float32),
        grid=(m_pad // tm, n_pad // tn),
        in_specs=[
            pl.BlockSpec((1, tn), lambda i, j: (0, j)),
            pl.BlockSpec((tn, c1), lambda i, j: (j, 0)),
        ],
        out_specs=pl.BlockSpec((tm, c1), lambda i, j: (i, 0)),
        scratch_shapes=[pltpu.VMEM((tm, c1), jnp.float32)],
        compiler_params=pltpu.CompilerParams(
            dimension_semantics=("parallel", "arbitrary")),
    )(seg, fa)
    return out[:num_segments, :c]


# ----------------------------------------------------------------------------
# Kernel 2: submanifold sparse conv (27 offsets fused into one big-K matmul)
#           + fused BatchNorm1d(eval) + ReLU epilogue.
#   x_ref     : [tv, 27*Cin_pad]  gathered neighbor features
#   w_ref     : [27*Cin_pad, Cout]
#   scale_ref : [1, Cout]   gamma * rsqrt(var + eps)
#   bias_ref  : [1, Cout]   beta - mean * scale
# ----------------------------------------------------------------------------
def _conv_bn_relu_kernel(x_ref, w_ref, scale_ref, bias_ref, out_ref):
    y = jnp.dot(x_ref[...], w_ref[...], preferred_element_type=jnp.float32)
    out_ref[...] = jnp.maximum(y * scale_ref[...] + bias_ref[...], 0.0)


def subm_conv3d_bn_relu(voxel_feats, voxel_coords, weight, scale, bias,
                        spatial_shape, *, tv=256):
    """spconv.SubMConv3d(k=3, padding=1, bias=False) on a voxel list, fused
    with eval-mode BatchNorm1d + ReLU.

    voxel_feats : [V, Cin]  float32
    voxel_coords: [V, 4]    int32  (batch, z, y, x), rows unique
    weight      : [27, Cin, Cout]  (dz,dy,dx raster order)
    """
    v, cin = voxel_feats.shape
    k, _, cout = weight.shape
    cin_pad = _round_up(cin, 8)          # 6 -> 8: dense lane packing

    # ---- rulebook via sort + searchsorted (glue, O(27 V log V)) ----
    s = int(spatial_shape)
    b = voxel_coords[:, 0].astype(jnp.int32)
    z = voxel_coords[:, 1].astype(jnp.int32)
    y = voxel_coords[:, 2].astype(jnp.int32)
    x = voxel_coords[:, 3].astype(jnp.int32)
    key = ((b * s + z) * s + y) * s + x
    order = jnp.argsort(key)
    skey = key[order]

    off = jnp.array([(dz, dy, dx) for dz in (-1, 0, 1)
                     for dy in (-1, 0, 1) for dx in (-1, 0, 1)], jnp.int32)
    tz = z[None, :] + off[:, 0:1]
    ty = y[None, :] + off[:, 1:2]
    tx = x[None, :] + off[:, 2:3]
    inb = ((tz >= 0) & (tz < s) & (ty >= 0) & (ty < s)
           & (tx >= 0) & (tx < s))
    tkey = ((b[None, :] * s + tz) * s + ty) * s + tx
    pos = jnp.clip(jnp.searchsorted(skey, tkey), 0, v - 1)
    found = inb & (skey[pos] == tkey)
    nb_idx = order[pos]                                   # [27, V]

    feats_pad = jnp.pad(voxel_feats.astype(jnp.float32),
                        ((0, 0), (0, cin_pad - cin)))
    g = jnp.where(found[:, :, None], feats_pad[nb_idx], 0.0)   # [27, V, Cp]
    kk = k * cin_pad
    xg = jnp.transpose(g, (1, 0, 2)).reshape(v, kk)             # [V, 216]

    w = jnp.pad(weight, ((0, 0), (0, cin_pad - cin), (0, 0))).reshape(kk, cout)

    tv = min(tv, _round_up(v, 8))
    v_pad = _round_up(v, tv)
    xg = jnp.pad(xg, ((0, v_pad - v), (0, 0)))

    out = pl.pallas_call(
        _conv_bn_relu_kernel,
        out_shape=jax.ShapeDtypeStruct((v_pad, cout), jnp.float32),
        grid=(v_pad // tv,),
        in_specs=[
            pl.BlockSpec((tv, kk), lambda i: (i, 0)),
            pl.BlockSpec((kk, cout), lambda i: (0, 0)),
            pl.BlockSpec((1, cout), lambda i: (0, 0)),
            pl.BlockSpec((1, cout), lambda i: (0, 0)),
        ],
        out_specs=pl.BlockSpec((tv, cout), lambda i: (i, 0)),
        compiler_params=pltpu.CompilerParams(
            dimension_semantics=("parallel",)),
    )(xg, w, scale.reshape(1, cout), bias.reshape(1, cout))
    return out[:v]


# ----------------------------------------------------------------------------
# MODEL forward (the portion of model.py implementable here):
#   voxelization -> input_conv -> [unet: TODO] -> output_layer ->
#   devoxelization -> superpoint mean pool ; plus scatter_mean(coords_float).
# ----------------------------------------------------------------------------
@functools.partial(jax.jit,
                   static_argnames=("num_voxels", "num_superpoints",
                                    "spatial_shape"))
def model_forward(params, feats, coords_float, voxel_coords, point2voxel,
                  superpoints, *, num_voxels, num_superpoints, spatial_shape):
    # pointgroup_ops.voxelization(feats, v2p_map)  (mean mode)
    voxel_feats = scatter_mean(feats, point2voxel, num_voxels)         # [V, 6]

    # self.input_conv : SubMConv3d(6 -> 32, k=3, bias=False)
    # TODO(synk): self.unet (UBlock of ResidualBlocks) not implemented — identity.
    # self.output_layer : BatchNorm1d(32, eps=1e-4)+ReLU fused into conv epilogue.
    scale = params["bn_gamma"] * jax.lax.rsqrt(params["bn_rvar"] + 1e-4)
    bias = params["bn_beta"] - params["bn_rmean"] * scale
    x = subm_conv3d_bn_relu(voxel_feats, voxel_coords, params["conv_w"],
                            scale, bias, spatial_shape)                 # [V, 32]

    # x = x.features[p2v_map.long()]   (devoxelization gather — glue)
    p_feats = jnp.take(x, point2voxel, axis=0)                          # [P, 32]

    # fused: scatter_mean(p_feats) and scatter_mean(coords_float) over
    # superpoints in a single pooling call.
    fused = jnp.concatenate([p_feats, coords_float], axis=1)            # [P, 35]
    sp = scatter_mean(fused, superpoints, num_superpoints)              # [M, 35]
    sp_feats = sp[:, :p_feats.shape[1]]
    sp_coords_float = sp[:, p_feats.shape[1]:]

    # TODO(synk): bert_encoder / MDIN / Criterion / FurthestPointSampling omitted.
    return sp_feats, sp_coords_float


# ----------------------------------------------------------------------------
# Main
# ----------------------------------------------------------------------------
if __name__ == "__main__":
    key = jax.random.PRNGKey(0)
    k1, k2, k3, k4, k5, k6 = jax.random.split(key, 6)

    P = 256           # points
    V = 128           # active voxels
    M = 64            # superpoints
    CIN = 6           # input_channel
    MEDIA = 32        # media
    SPATIAL = 8       # spatial grid side (spatial_shape = [8, 8, 8])

    # Point features (xyz + rgb style) and float coordinates.
    feats = jax.random.normal(k1, (P, CIN), dtype=jnp.float32)
    coords_float = jax.random.uniform(k2, (P, 3), dtype=jnp.float32) * float(SPATIAL)

    # V unique voxel coordinates inside the 8^3 grid, single batch element.
    flat = jax.random.permutation(k3, SPATIAL ** 3)[:V]
    vz = flat // (SPATIAL * SPATIAL)
    vy = (flat // SPATIAL) % SPATIAL
    vx = flat % SPATIAL
    voxel_coords = jnp.stack(
        [jnp.zeros_like(vz), vz, vy, vx], axis=1).astype(jnp.int32)      # [V, 4]

    # point -> voxel map (p2v_map) and point -> superpoint map.
    point2voxel = jax.random.randint(k4, (P,), 0, V, dtype=jnp.int32)
    superpoints = jax.random.randint(k5, (P,), 0, M, dtype=jnp.int32)

    # Deterministic parameters (shapes from __init__; init_weights -> BN 1/0).
    params = {
        "conv_w": 0.1 * jax.random.normal(k6, (27, CIN, MEDIA), dtype=jnp.float32),
        "bn_gamma": jnp.ones((MEDIA,), jnp.float32),
        "bn_beta": jnp.zeros((MEDIA,), jnp.float32),
        "bn_rmean": jnp.zeros((MEDIA,), jnp.float32),
        "bn_rvar": jnp.ones((MEDIA,), jnp.float32),
    }

    sp_feats, sp_coords_float = model_forward(
        params, feats, coords_float, voxel_coords, point2voxel, superpoints,
        num_voxels=V, num_superpoints=M, spatial_shape=SPATIAL,
    )
    jax.block_until_ready((sp_feats, sp_coords_float))
    assert sp_feats.shape == (M, MEDIA) and sp_coords_float.shape == (M, 3)
    print("KERNEL_OK")
</pallas_src>

<mosaic_0001>
module attributes {stable_mosaic.version = 11 : i64} {
  func.func @_scatter_mean_kernel(%arg0: i32, %arg1: i32, %arg2: memref<1x256xi32, #tpu.memory_space<vmem>>, %arg3: memref<256x7xf32, #tpu.memory_space<vmem>>, %arg4: memref<128x7xf32, #tpu.memory_space<vmem>>, %arg5: memref<128x7xf32, #tpu.memory_space<vmem>>) attributes {dimension_semantics = [#tpu.dimension_semantics<parallel>, #tpu.dimension_semantics<arbitrary>], iteration_bounds = array<i64: 1, 1>, scalar_prefetch = 0 : i64, scratch_operands = 1 : i64, tpu.core_type = #tpu.core_type<tc>, window_params = [{transform_indices = @transform_0, window_bounds = array<i64: 1, 256>}, {transform_indices = @transform_1, window_bounds = array<i64: 256, 7>}, {transform_indices = @transform_2, window_bounds = array<i64: 128, 7>}]} {
    %c0_i32 = arith.constant 0 : i32
    %0 = arith.cmpi eq, %arg1, %c0_i32 : i32
    %1 = arith.extui %0 : i1 to i32
    %c0_i32_0 = arith.constant 0 : i32
    %2 = arith.cmpi ne, %1, %c0_i32_0 : i32
    scf.if %2 {
      %cst_10 = arith.constant 0.000000e+00 : f32
      %20 = vector.broadcast %cst_10 : f32 to vector<128x7xf32>
      %c0_11 = arith.constant 0 : index
      %c0_12 = arith.constant 0 : index
      %21 = vector.load %arg5[%c0_11, %c0_12] : memref<128x7xf32, #tpu.memory_space<vmem>>, vector<128x7xf32>
      tpu.vector_store %arg5[%c0_11, %c0_12], %20 {strides = array<i32>} : memref<128x7xf32, #tpu.memory_space<vmem>>, vector<128x7xf32>,
    } else {
    }
    %c0 = arith.constant 0 : index
    %c0_1 = arith.constant 0 : index
    %3 = vector.load %arg2[%c0, %c0_1] : memref<1x256xi32, #tpu.memory_space<vmem>>, vector<1x256xi32>
    %4 = tpu.iota {dimensions = array<i32: 0>} : vector<128x256xi32>
    %c128_i32 = arith.constant 128 : i32
    %5 = arith.muli %arg0, %c128_i32 : i32
    %6 = vector.broadcast %5 : i32 to vector<128x256xi32>
    %7 = arith.addi %4, %6 : vector<128x256xi32>
    %8 = vector.broadcast %3 : vector<1x256xi32> to vector<128x256xi32>
    %9 = arith.cmpi eq, %7, %8 : vector<128x256xi32>
    %10 = arith.extui %9 : vector<128x256xi1> to vector<128x256xi32>
    %11 = arith.sitofp %10 : vector<128x256xi32> to vector<128x256xf32>
    %c0_2 = arith.constant 0 : index
    %c0_3 = arith.constant 0 : index
    %12 = vector.load %arg5[%c0_2, %c0_3] : memref<128x7xf32, #tpu.memory_space<vmem>>, vector<128x7xf32>
    %c0_4 = arith.constant 0 : index
    %c0_5 = arith.constant 0 : index
    %13 = vector.load %arg3[%c0_4, %c0_5] : memref<256x7xf32, #tpu.memory_space<vmem>>, vector<256x7xf32>
    %cst = arith.constant dense<0.000000e+00> : vector<128x7xf32>
    %14 = tpu.matmul %11, %13, %cst {dimension_numbers = #tpu.dot_dimension_numbers<[1], [0], [0], [1], [0, 0, 1, 1], [], []>} : vector<128x256xf32>, vector<256x7xf32>, vector<128x7xf32> -> vector<128x7xf32>
    %15 = arith.addf %12, %14 : vector<128x7xf32>
    %c0_6 = arith.constant 0 : index
    %c0_7 = arith.constant 0 : index
    %16 = vector.load %arg5[%c0_6, %c0_7] : memref<128x7xf32, #tpu.memory_space<vmem>>, vector<128x7xf32>
    tpu.vector_store %arg5[%c0_6, %c0_7], %15 {strides = array<i32>} : memref<128x7xf32, #tpu.memory_space<vmem>>, vector<128x7xf32>,
    %c0_i32_8 = arith.constant 0 : i32
    %17 = arith.cmpi eq, %arg1, %c0_i32_8 : i32
    %18 = arith.extui %17 : i1 to i32
    %c0_i32_9 = arith.constant 0 : i32
    %19 = arith.cmpi ne, %18, %c0_i32_9 : i32
    scf.if %19 {
      %c0_10 = arith.constant 0 : index
      %c0_11 = arith.constant 0 : index
      %20 = vector.load %arg5[%c0_10, %c0_11] : memref<128x7xf32, #tpu.memory_space<vmem>>, vector<128x7xf32>
      %21 = vector.extract_strided_slice %20 {offsets = [0, 6], sizes = [128, 1], strides = [1, 1]} : vector<128x7xf32> to vector<128x1xf32>
      %cst_12 = arith.constant 1.000000e+00 : f32
      %22 = vector.broadcast %cst_12 : f32 to vector<128x1xf32>
      %23 = arith.maximumf %21, %22 : vector<128x1xf32>
      %24 = vector.broadcast %23 : vector<128x1xf32> to vector<128x7xf32>
      %25 = arith.divf %20, %24 : vector<128x7xf32>
      %c0_13 = arith.constant 0 : index
      %c0_14 = arith.constant 0 : index
      %26 = vector.load %arg4[%c0_13, %c0_14] : memref<128x7xf32, #tpu.memory_space<vmem>>, vector<128x7xf32>
      tpu.vector_store %arg4[%c0_13, %c0_14], %25 {strides = array<i32>} : memref<128x7xf32, #tpu.memory_space<vmem>>, vector<128x7xf32>,
    } else {
    }
    return
  }
  func.func @transform_0(%arg0: i32, %arg1: i32) -> (i32, i32) {
    %c0_i32 = arith.constant 0 : i32
    %c0_i32_0 = arith.constant 0 : i32
    return %c0_i32, %arg1 : i32, i32
  }
  func.func @transform_1(%arg0: i32, %arg1: i32) -> (i32, i32) {
    %c0_i32 = arith.constant 0 : i32
    %c0_i32_0 = arith.constant 0 : i32
    return %arg1, %c0_i32 : i32, i32
  }
  func.func @transform_2(%arg0: i32, %arg1: i32) -> (i32, i32) {
    %c0_i32 = arith.constant 0 : i32
    %c0_i32_0 = arith.constant 0 : i32
    return %arg0, %c0_i32 : i32, i32
  }
}

module attributes {stable_mosaic.version = 11 : i64} {
  func.func @_conv_bn_relu_kernel(%arg0: i32, %arg1: memref<128x216xf32, #tpu.memory_space<vmem>>, %arg2: memref<216x32xf32, #tpu.memory_space<vmem>>, %arg3: memref<1x32xf32, #tpu.memory_space<vmem>>, %arg4: memref<1x32xf32, #tpu.memory_space<vmem>>, %arg5: memref<128x32xf32, #tpu.memory_space<vmem>>) attributes {dimension_semantics = [#tpu.dimension_semantics<parallel>], iteration_bounds = array<i64: 1>, scalar_prefetch = 0 : i64, scratch_operands = 0 : i64, tpu.core_type = #tpu.core_type<tc>, window_params = [{transform_indices = @transform_0, window_bounds = array<i64: 128, 216>}, {pipeline_mode = #tpu.pipeline_mode<synchronous>, transform_indices = @transform_1, window_bounds = array<i64: 216, 32>}, {pipeline_mode = #tpu.pipeline_mode<synchronous>, transform_indices = @transform_2, window_bounds = array<i64: 1, 32>}, {pipeline_mode = #tpu.pipeline_mode<synchronous>, transform_indices = @transform_3, window_bounds = array<i64: 1, 32>}, {transform_indices = @transform_4, window_bounds = array<i64: 128, 32>}]} {
    %c0 = arith.constant 0 : index
    %c0_0 = arith.constant 0 : index
    %0 = vector.load %arg1[%c0, %c0_0] : memref<128x216xf32, #tpu.memory_space<vmem>>, vector<128x216xf32>
    %c0_1 = arith.constant 0 : index
    %c0_2 = arith.constant 0 : index
    %1 = vector.load %arg2[%c0_1, %c0_2] : memref<216x32xf32, #tpu.memory_space<vmem>>, vector<216x32xf32>
    %cst = arith.constant dense<0.000000e+00> : vector<128x32xf32>
    %2 = tpu.matmul %0, %1, %cst {dimension_numbers = #tpu.dot_dimension_numbers<[1], [0], [0], [1], [0, 0, 1, 1], [], []>} : vector<128x216xf32>, vector<216x32xf32>, vector<128x32xf32> -> vector<128x32xf32>
    %c0_3 = arith.constant 0 : index
    %c0_4 = arith.constant 0 : index
    %3 = vector.load %arg3[%c0_3, %c0_4] : memref<1x32xf32, #tpu.memory_space<vmem>>, vector<1x32xf32>
    %4 = vector.broadcast %3 : vector<1x32xf32> to vector<128x32xf32>
    %5 = arith.mulf %2, %4 : vector<128x32xf32>
    %c0_5 = arith.constant 0 : index
    %c0_6 = arith.constant 0 : index
    %6 = vector.load %arg4[%c0_5, %c0_6] : memref<1x32xf32, #tpu.memory_space<vmem>>, vector<1x32xf32>
    %7 = vector.broadcast %6 : vector<1x32xf32> to vector<128x32xf32>
    %8 = arith.addf %5, %7 : vector<128x32xf32>
    %cst_7 = arith.constant 0.000000e+00 : f32
    %9 = vector.broadcast %cst_7 : f32 to vector<128x32xf32>
    %10 = arith.maximumf %8, %9 : vector<128x32xf32>
    %c0_8 = arith.constant 0 : index
    %c0_9 = arith.constant 0 : index
    %11 = vector.load %arg5[%c0_8, %c0_9] : memref<128x32xf32, #tpu.memory_space<vmem>>, vector<128x32xf32>
    tpu.vector_store %arg5[%c0_8, %c0_9], %10 {strides = array<i32>} : memref<128x32xf32, #tpu.memory_space<vmem>>, vector<128x32xf32>,
    return
  }
  func.func @transform_0(%arg0: i32) -> (i32, i32) {
    %c0_i32 = arith.constant 0 : i32
    %c0_i32_0 = arith.constant 0 : i32
    return %arg0, %c0_i32 : i32, i32
  }
  func.func @transform_1(%arg0: i32) -> (i32, i32) {
    %c0_i32 = arith.constant 0 : i32
    %c0_i32_0 = arith.constant 0 : i32
    %c0_i32_1 = arith.constant 0 : i32
    return %c0_i32, %c0_i32_0 : i32, i32
  }
  func.func @transform_2(%arg0: i32) -> (i32, i32) {
    %c0_i32 = arith.constant 0 : i32
    %c0_i32_0 = arith.constant 0 : i32
    %c0_i32_1 = arith.constant 0 : i32
    return %c0_i32, %c0_i32_0 : i32, i32
  }
  func.func @transform_3(%arg0: i32) -> (i32, i32) {
    %c0_i32 = arith.constant 0 : i32
    %c0_i32_0 = arith.constant 0 : i32
    %c0_i32_1 = arith.constant 0 : i32
    return %c0_i32, %c0_i32_0 : i32, i32
  }
  func.func @transform_4(%arg0: i32) -> (i32, i32) {
    %c0_i32 = arith.constant 0 : i32
    %c0_i32_0 = arith.constant 0 : i32
    return %arg0, %c0_i32 : i32, i32
  }
}

module attributes {stable_mosaic.version = 11 : i64} {
  func.func @_scatter_mean_kernel(%arg0: i32, %arg1: i32, %arg2: memref<1x256xi32, #tpu.memory_space<vmem>>, %arg3: memref<256x36xf32, #tpu.memory_space<vmem>>, %arg4: memref<64x36xf32, #tpu.memory_space<vmem>>, %arg5: memref<64x36xf32, #tpu.memory_space<vmem>>) attributes {dimension_semantics = [#tpu.dimension_semantics<parallel>, #tpu.dimension_semantics<arbitrary>], iteration_bounds = array<i64: 1, 1>, scalar_prefetch = 0 : i64, scratch_operands = 1 : i64, tpu.core_type = #tpu.core_type<tc>, window_params = [{transform_indices = @transform_0, window_bounds = array<i64: 1, 256>}, {transform_indices = @transform_1, window_bounds = array<i64: 256, 36>}, {transform_indices = @transform_2, window_bounds = array<i64: 64, 36>}]} {
    %c0_i32 = arith.constant 0 : i32
    %0 = arith.cmpi eq, %arg1, %c0_i32 : i32
    %1 = arith.extui %0 : i1 to i32
    %c0_i32_0 = arith.constant 0 : i32
    %2 = arith.cmpi ne, %1, %c0_i32_0 : i32
    scf.if %2 {
      %cst_10 = arith.constant 0.000000e+00 : f32
      %20 = vector.broadcast %cst_10 : f32 to vector<64x36xf32>
      %c0_11 = arith.constant 0 : index
      %c0_12 = arith.constant 0 : index
      %21 = vector.load %arg5[%c0_11, %c0_12] : memref<64x36xf32, #tpu.memory_space<vmem>>, vector<64x36xf32>
      tpu.vector_store %arg5[%c0_11, %c0_12], %20 {strides = array<i32>} : memref<64x36xf32, #tpu.memory_space<vmem>>, vector<64x36xf32>,
    } else {
    }
    %c0 = arith.constant 0 : index
    %c0_1 = arith.constant 0 : index
    %3 = vector.load %arg2[%c0, %c0_1] : memref<1x256xi32, #tpu.memory_space<vmem>>, vector<1x256xi32>
    %4 = tpu.iota {dimensions = array<i32: 0>} : vector<64x256xi32>
    %c64_i32 = arith.constant 64 : i32
    %5 = arith.muli %arg0, %c64_i32 : i32
    %6 = vector.broadcast %5 : i32 to vector<64x256xi32>
    %7 = arith.addi %4, %6 : vector<64x256xi32>
    %8 = vector.broadcast %3 : vector<1x256xi32> to vector<64x256xi32>
    %9 = arith.cmpi eq, %7, %8 : vector<64x256xi32>
    %10 = arith.extui %9 : vector<64x256xi1> to vector<64x256xi32>
    %11 = arith.sitofp %10 : vector<64x256xi32> to vector<64x256xf32>
    %c0_2 = arith.constant 0 : index
    %c0_3 = arith.constant 0 : index
    %12 = vector.load %arg5[%c0_2, %c0_3] : memref<64x36xf32, #tpu.memory_space<vmem>>, vector<64x36xf32>
    %c0_4 = arith.constant 0 : index
    %c0_5 = arith.constant 0 : index
    %13 = vector.load %arg3[%c0_4, %c0_5] : memref<256x36xf32, #tpu.memory_space<vmem>>, vector<256x36xf32>
    %cst = arith.constant dense<0.000000e+00> : vector<64x36xf32>
    %14 = tpu.matmul %11, %13, %cst {dimension_numbers = #tpu.dot_dimension_numbers<[1], [0], [0], [1], [0, 0, 1, 1], [], []>} : vector<64x256xf32>, vector<256x36xf32>, vector<64x36xf32> -> vector<64x36xf32>
    %15 = arith.addf %12, %14 : vector<64x36xf32>
    %c0_6 = arith.constant 0 : index
    %c0_7 = arith.constant 0 : index
    %16 = vector.load %arg5[%c0_6, %c0_7] : memref<64x36xf32, #tpu.memory_space<vmem>>, vector<64x36xf32>
    tpu.vector_store %arg5[%c0_6, %c0_7], %15 {strides = array<i32>} : memref<64x36xf32, #tpu.memory_space<vmem>>, vector<64x36xf32>,
    %c0_i32_8 = arith.constant 0 : i32
    %17 = arith.cmpi eq, %arg1, %c0_i32_8 : i32
    %18 = arith.extui %17 : i1 to i32
    %c0_i32_9 = arith.constant 0 : i32
    %19 = arith.cmpi ne, %18, %c0_i32_9 : i32
    scf.if %19 {
      %c0_10 = arith.constant 0 : index
      %c0_11 = arith.constant 0 : index
      %20 = vector.load %arg5[%c0_10, %c0_11] : memref<64x36xf32, #tpu.memory_space<vmem>>, vector<64x36xf32>
      %21 = vector.extract_strided_slice %20 {offsets = [0, 35], sizes = [64, 1], strides = [1, 1]} : vector<64x36xf32> to vector<64x1xf32>
      %cst_12 = arith.constant 1.000000e+00 : f32
      %22 = vector.broadcast %cst_12 : f32 to vector<64x1xf32>
      %23 = arith.maximumf %21, %22 : vector<64x1xf32>
      %24 = vector.broadcast %23 : vector<64x1xf32> to vector<64x36xf32>
      %25 = arith.divf %20, %24 : vector<64x36xf32>
      %c0_13 = arith.constant 0 : index
      %c0_14 = arith.constant 0 : index
      %26 = vector.load %arg4[%c0_13, %c0_14] : memref<64x36xf32, #tpu.memory_space<vmem>>, vector<64x36xf32>
      tpu.vector_store %arg4[%c0_13, %c0_14], %25 {strides = array<i32>} : memref<64x36xf32, #tpu.memory_space<vmem>>, vector<64x36xf32>,
    } else {
    }
    return
  }
  func.func @transform_0(%arg0: i32, %arg1: i32) -> (i32, i32) {
    %c0_i32 = arith.constant 0 : i32
    %c0_i32_0 = arith.constant 0 : i32
    return %c0_i32, %arg1 : i32, i32
  }
  func.func @transform_1(%arg0: i32, %arg1: i32) -> (i32, i32) {
    %c0_i32 = arith.constant 0 : i32
    %c0_i32_0 = arith.constant 0 : i32
    return %arg1, %c0_i32 : i32, i32
  }
  func.func @transform_2(%arg0: i32, %arg1: i32) -> (i32, i32) {
    %c0_i32 = arith.constant 0 : i32
    %c0_i32_0 = arith.constant 0 : i32
    return %arg0, %c0_i32 : i32, i32
  }
}

</mosaic_0001>

<llo_original>
// kernel: custom-call
$region0: #{custom-call}
  %s0 = inlined_call_operand.vmem [shape: u32[27,128], index: 0, kind: output, shape index: {}]

// kernel: model_forward.3
$region0: #{model_forward.3}
  #allocation0 [shape = 'u32[]', space=smem, size = 0x4, offset = 0x4, fixed_abs, tag = 'smem constant byte address 0x4 - core index']
  #allocation1 [shape = 'u32[144,128]{1,0:T(1,128)}', space=vmem, size = 0x12000, scoped, tag = 'internal scratch']
  #allocation2 [shape = 'f32[128,7]{1,0:T(8,128)}', space=vmem, size = 0x10000, scoped, tag = 'scratch operand']
  %s0 = inlined_call_operand.vmem [shape: s32[1,256], index: 0, kind: input, shape index: {}]
  %s1 = inlined_call_operand.vmem [shape: f32[256,7], index: 1, kind: input, shape index: {}]
  %s2 = inlined_call_operand.vmem [shape: f32[128,7], index: 2, kind: output, shape index: {}]
  %s3 = sld [smem:[#allocation0]]
  $region26: #{model_forward.3} parent=0
    _
  %s5 = ssub.s32 1, %s3
  %s6 = scalar_select 0, %s5, %s3
  // Predicated region
  $region2: #{model_forward.3} parent=0 // pred_check
    _
  $region3: #{model_forward.3} parent=0 // pred_check_branch
    %8 = sbr.rel (0) target = $region5
  $region4: #{model_forward.3} parent=0 // pred_region
    _
  $region5: #{model_forward.3} parent=0 // pred_fallthru
    _
  // Predicated region
  $region6: #{model_forward.3} parent=0 // pred_check
    _
  $region7: #{model_forward.3} parent=0 // pred_check_branch
    %10 = sbr.rel (0) target = $region9
  $region8: #{model_forward.3} parent=0 // pred_region
    _
  $region9: #{model_forward.3} parent=0 // pred_fallthru
    _
  %p11 = scmp.eq.s32.totalorder 0, 0
  // Predicated region
  $region10: #{model_forward.3} parent=0 // pred_check
    %p12 = pneg %p11
  $region11: #{model_forward.3} parent=0 // pred_check_branch
    %14 = sbr.rel (%p12) target = $region13
  $region12: #{model_forward.3} parent=0 // pred_region
    %vm15 = vcmask 56320
    %16 = vst.msk [vmem:[#allocation2] sm:$0xff] %vm15, 0.0
    %17 = vst.msk [vmem:[#allocation2 + $0x8] sm:$0xff] %vm15, 0.0
    %18 = vst.msk [vmem:[#allocation2 + $0x10] sm:$0xff] %vm15, 0.0
    %19 = vst.msk [vmem:[#allocation2 + $0x18] sm:$0xff] %vm15, 0.0
    %20 = vst.msk [vmem:[#allocation2 + $0x20] sm:$0xff] %vm15, 0.0
    %21 = vst.msk [vmem:[#allocation2 + $0x28] sm:$0xff] %vm15, 0.0
    %22 = vst.msk [vmem:[#allocation2 + $0x30] sm:$0xff] %vm15, 0.0
    %23 = vst.msk [vmem:[#allocation2 + $0x38] sm:$0xff] %vm15, 0.0
    %24 = vst.msk [vmem:[#allocation2 + $0x40] sm:$0xff] %vm15, 0.0
    %25 = vst.msk [vmem:[#allocation2 + $0x48] sm:$0xff] %vm15, 0.0
    %26 = vst.msk [vmem:[#allocation2 + $0x50] sm:$0xff] %vm15, 0.0
    %27 = vst.msk [vmem:[#allocation2 + $0x58] sm:$0xff] %vm15, 0.0
    %28 = vst.msk [vmem:[#allocation2 + $0x60] sm:$0xff] %vm15, 0.0
    %29 = vst.msk [vmem:[#allocation2 + $0x68] sm:$0xff] %vm15, 0.0
    %30 = vst.msk [vmem:[#allocation2 + $0x70] sm:$0xff] %vm15, 0.0
    %31 = vst.msk [vmem:[#allocation2 + $0x78] sm:$0xff] %vm15, 0.0
  $region13: #{model_forward.3} parent=0 // pred_fallthru
    _
  %v32 = vld [vmem:[%s0] sm:$0x3]
  %v33 = vlaneseq
  %v34 = vshrl.u32 %v33, 7
  %v35 = vadd.s32 %v34, 8
  %v36 = vadd.s32 %v34, 16
  %v37 = vadd.s32 %v34, 24
  %v38 = vadd.s32 %v34, 32
  %v39 = vadd.s32 %v34, 40
  %v40 = vadd.s32 %v34, 48
  %v41 = vadd.s32 %v34, 56
  %v42 = vadd.s32 %v34, 64
  %v43 = vadd.s32 %v34, 72
  %v44 = vadd.s32 %v34, 80
  %v45 = vadd.s32 %v34, 88
  %v46 = vadd.s32 %v34, 96
  %v47 = vadd.s32 %v34, 104
  %v48 = vadd.s32 %v34, 112
  %v49 = vadd.s32 %v34, 120
  %s50 = smul.u32 0, 128
  %v51 = vstv %s50
  %v52 = vadd.s32 %v34, %v51
  %v53 = vadd.s32 %v35, %v51
  %v54 = vadd.s32 %v36, %v51
  %v55 = vadd.s32 %v37, %v51
  %v56 = vadd.s32 %v38, %v51
  %v57 = vadd.s32 %v39, %v51
  %v58 = vadd.s32 %v40, %v51
  %v59 = vadd.s32 %v41, %v51
  %v60 = vadd.s32 %v42, %v51
  %v61 = vadd.s32 %v43, %v51
  %v62 = vadd.s32 %v44, %v51
  %v63 = vadd.s32 %v45, %v51
  %v64 = vadd.s32 %v46, %v51
  %v65 = vadd.s32 %v47, %v51
  %v66 = vadd.s32 %v48, %v51
  %v67 = vadd.s32 %v49, %v51
  %v68 = vlaneseq
  %v69 = vshrl.u32 %v68, 7
  %v70 = vsub.s32 0, %v69
  %v71 = vrot.slane %v32, %v70
  %v72 = vlaneseq
  %v73 = vshrl.u32 %v72, 7
  %v74 = vsub.s32 1, %v73
  %v75 = vrot.slane %v32, %v74
  %vm76 = vcmp.eq.s32.totalorder %v52, %v71
  %vm77 = vcmp.eq.s32.totalorder %v52, %v75
  %vm78 = vcmp.eq.s32.totalorder %v53, %v71
  %vm79 = vcmp.eq.s32.totalorder %v53, %v75
  %vm80 = vcmp.eq.s32.totalorder %v54, %v71
  %vm81 = vcmp.eq.s32.totalorder %v54, %v75
  %vm82 = vcmp.eq.s32.totalorder %v55, %v71
  %vm83 = vcmp.eq.s32.totalorder %v55, %v75
  %vm84 = vcmp.eq.s32.totalorder %v56, %v71
  %vm85 = vcmp.eq.s32.totalorder %v56, %v75
  %vm86 = vcmp.eq.s32.totalorder %v57, %v71
  %vm87 = vcmp.eq.s32.totalorder %v57, %v75
  %vm88 = vcmp.eq.s32.totalorder %v58, %v71
  %vm89 = vcmp.eq.s32.totalorder %v58, %v75
  %vm90 = vcmp.eq.s32.totalorder %v59, %v71
  %vm91 = vcmp.eq.s32.totalorder %v59, %v75
  %vm92 = vcmp.eq.s32.totalorder %v60, %v71
  %vm93 = vcmp.eq.s32.totalorder %v60, %v75
  %vm94 = vcmp.eq.s32.totalorder %v61, %v71
  %vm95 = vcmp.eq.s32.totalorder %v61, %v75
  %vm96 = vcmp.eq.s32.totalorder %v62, %v71
  %vm97 = vcmp.eq.s32.totalorder %v62, %v75
  %vm98 = vcmp.eq.s32.totalorder %v63, %v71
  %vm99 = vcmp.eq.s32.totalorder %v63, %v75
  %vm100 = vcmp.eq.s32.totalorder %v64, %v71
  %vm101 = vcmp.eq.s32.totalorder %v64, %v75
  %vm102 = vcmp.eq.s32.totalorder %v65, %v71
  %vm103 = vcmp.eq.s32.totalorder %v65, %v75
  %vm104 = vcmp.eq.s32.totalorder %v66, %v71
  %vm105 = vcmp.eq.s32.totalorder %v66, %v75
  %vm106 = vcmp.eq.s32.totalorder %v67, %v71
  %vm107 = vcmp.eq.s32.totalorder %v67, %v75
  %v108 = vsel %vm76, 1, 0
  %v109 = vsel %vm77, 1, 0
  %v110 = vsel %vm78, 1, 0
  %v111 = vsel %vm79, 1, 0
  %v112 = vsel %vm80, 1, 0
  %v113 = vsel %vm81, 1, 0
  %v114 = vsel %vm82, 1, 0
  %v115 = vsel %vm83, 1, 0
  %v116 = vsel %vm84, 1, 0
  %v117 = vsel %vm85, 1, 0
  %v118 = vsel %vm86, 1, 0
  %v119 = vsel %vm87, 1, 0
  %v120 = vsel %vm88, 1, 0
  %v121 = vsel %vm89, 1, 0
  %v122 = vsel %vm90, 1, 0
  %v123 = vsel %vm91, 1, 0
  %v124 = vsel %vm92, 1, 0
  %v125 = vsel %vm93, 1, 0
  %v126 = vsel %vm94, 1, 0
  %v127 = vsel %vm95, 1, 0
  %v128 = vsel %vm96, 1, 0
  %v129 = vsel %vm97, 1, 0
  %v130 = vsel %vm98, 1, 0
  %v131 = vsel %vm99, 1, 0
  %v132 = vsel %vm100, 1, 0
  %v133 = vsel %vm101, 1, 0
  %v134 = vsel %vm102, 1, 0
  %v135 = vsel %vm103, 1, 0
  %v136 = vsel %vm104, 1, 0
  %v137 = vsel %vm105, 1, 0
  %v138 = vsel %vm106, 1, 0
  %v139 = vsel %vm107, 1, 0
  %v140 = vcvt.s32.f32 %v108
  %v141 = vcvt.s32.f32 %v109
  %v142 = vcvt.s32.f32 %v110
  %v143 = vcvt.s32.f32 %v111
  %v144 = vcvt.s32.f32 %v112
  %v145 = vcvt.s32.f32 %v113
  %v146 = vcvt.s32.f32 %v114
  %v147 = vcvt.s32.f32 %v115
  %v148 = vcvt.s32.f32 %v116
  %v149 = vcvt.s32.f32 %v117
  %v150 = vcvt.s32.f32 %v118
  %v151 = vcvt.s32.f32 %v119
  %v152 = vcvt.s32.f32 %v120
  %v153 = vcvt.s32.f32 %v121
  %v154 = vcvt.s32.f32 %v122
  %v155 = vcvt.s32.f32 %v123
  %v156 = vcvt.s32.f32 %v124
  %v157 = vcvt.s32.f32 %v125
  %v158 = vcvt.s32.f32 %v126
  %v159 = vcvt.s32.f32 %v127
  %v160 = vcvt.s32.f32 %v128
  %v161 = vcvt.s32.f32 %v129
  %v162 = vcvt.s32.f32 %v130
  %v163 = vcvt.s32.f32 %v131
  %v164 = vcvt.s32.f32 %v132
  %v165 = vcvt.s32.f32 %v133
  %v166 = vcvt.s32.f32 %v134
  %v167 = vcvt.s32.f32 %v135
  %v168 = vcvt.s32.f32 %v136
  %v169 = vcvt.s32.f32 %v137
  %v170 = vcvt.s32.f32 %v138
  %v171 = vcvt.s32.f32 %v139
  %v172 = vld [vmem:[#allocation2] sm:$0xff]
  %v173 = vld [vmem:[#allocation2 + $0x8] sm:$0xff]
  %v174 = vld [vmem:[#allocation2 + $0x10] sm:$0xff]
  %v175 = vld [vmem:[#allocation2 + $0x18] sm:$0xff]
  %v176 = vld [vmem:[#allocation2 + $0x20] sm:$0xff]
  %v177 = vld [vmem:[#allocation2 + $0x28] sm:$0xff]
  %v178 = vld [vmem:[#allocation2 + $0x30] sm:$0xff]
  %v179 = vld [vmem:[#allocation2 + $0x38] sm:$0xff]
  %v180 = vld [vmem:[#allocation2 + $0x40] sm:$0xff]
  %v181 = vld [vmem:[#allocation2 + $0x48] sm:$0xff]
  %v182 = vld [vmem:[#allocation2 + $0x50] sm:$0xff]
  %v183 = vld [vmem:[#allocation2 + $0x58] sm:$0xff]
  %v184 = vld [vmem:[#allocation2 + $0x60] sm:$0xff]
  %v185 = vld [vmem:[#allocation2 + $0x68] sm:$0xff]
  %v186 = vld [vmem:[#allocation2 + $0x70] sm:$0xff]
  %v187 = vld [vmem:[#allocation2 + $0x78] sm:$0xff]
  %v188 = vld [vmem:[%s1] sm:$0xff]
  %v189 = vld [vmem:[%s1 + $0x8] sm:$0xff]
  %v190 = vld [vmem:[%s1 + $0x10] sm:$0xff]
  %v191 = vld [vmem:[%s1 + $0x18] sm:$0xff]
  %v192 = vld [vmem:[%s1 + $0x20] sm:$0xff]
  %v193 = vld [vmem:[%s1 + $0x28] sm:$0xff]
  %v194 = vld [vmem:[%s1 + $0x30] sm:$0xff]
  %v195 = vld [vmem:[%s1 + $0x38] sm:$0xff]
  %v196 = vld [vmem:[%s1 + $0x40] sm:$0xff]
  %v197 = vld [vmem:[%s1 + $0x48] sm:$0xff]
  %v198 = vld [vmem:[%s1 + $0x50] sm:$0xff]
  %v199 = vld [vmem:[%s1 + $0x58] sm:$0xff]
  %v200 = vld [vmem:[%s1 + $0x60] sm:$0xff]
  %v201 = vld [vmem:[%s1 + $0x68] sm:$0xff]
  %v202 = vld [vmem:[%s1 + $0x70] sm:$0xff]
  %v203 = vld [vmem:[%s1 + $0x78] sm:$0xff]
  %v204 = vld [vmem:[%s1 + $0x80] sm:$0xff]
  %v205 = vld [vmem:[%s1 + $0x88] sm:$0xff]
  %v206 = vld [vmem:[%s1 + $0x90] sm:$0xff]
  %v207 = vld [vmem:[%s1 + $0x98] sm:$0xff]
  %v208 = vld [vmem:[%s1 + $0xa0] sm:$0xff]
  %v209 = vld [vmem:[%s1 + $0xa8] sm:$0xff]
  %v210 = vld [vmem:[%s1 + $0xb0] sm:$0xff]
  %v211 = vld [vmem:[%s1 + $0xb8] sm:$0xff]
  %v212 = vld [vmem:[%s1 + $0xc0] sm:$0xff]
  %v213 = vld [vmem:[%s1 + $0xc8] sm:$0xff]
  %v214 = vld [vmem:[%s1 + $0xd0] sm:$0xff]
  %v215 = vld [vmem:[%s1 + $0xd8] sm:$0xff]
  %v216 = vld [vmem:[%s1 + $0xe0] sm:$0xff]
  %v217 = vld [vmem:[%s1 + $0xe8] sm:$0xff]
  %v218 = vld [vmem:[%s1 + $0xf0] sm:$0xff]
  %v219 = vld [vmem:[%s1 + $0xf8] sm:$0xff]
  %220 = vmatprep.subr.mxu0 0.0
  %221 = vmatpush1.msra.mxu0 %v188
  %222 = vmatprep.subr.mxu0 0.0
  %223 = vmatpush1.msra.mxu0 %v189
  %224 = vmatprep.subr.mxu0 0.0
  %225 = vmatpush1.msra.mxu0 %v190
  %226 = vmatprep.subr.mxu0 0.0
  %227 = vmatpush1.msra.mxu0 %v191
  %228 = vmatprep.subr.mxu0 0.0
  %229 = vmatpush1.msra.mxu0 %v192
  %230 = vmatprep.subr.mxu0 0.0
  %231 = vmatpush1.msra.mxu0 %v193
  %232 = vmatprep.subr.mxu0 0.0
  %233 = vmatpush1.msra.mxu0 %v194
  %234 = vmatprep.subr.mxu0 0.0
  %235 = vmatpush1.msra.mxu0 %v195
  %236 = vmatprep.subr.mxu0 0.0
  %237 = vmatpush1.msra.mxu0 %v196
  %238 = vmatprep.subr.mxu0 0.0
  %239 = vmatpush1.msra.mxu0 %v197
  %240 = vmatprep.subr.mxu0 0.0
  %241 = vmatpush1.msra.mxu0 %v198
  %242 = vmatprep.subr.mxu0 0.0
  %243 = vmatpush1.msra.mxu0 %v199
  %244 = vmatprep.subr.mxu0 0.0
  %245 = vmatpush1.msra.mxu0 %v200
  %246 = vmatprep.subr.mxu0 0.0
  %247 = vmatpush1.msra.mxu0 %v201
  %248 = vmatprep.subr.mxu0 0.0
  %249 = vmatpush1.msra.mxu0 %v202
  %250 = vmatprep.subr.mxu0 0.0
  %251 = vmatpush1.msra.mxu0 %v203
  %252 = vmatprep.subr.mxu0 0.0
  %253 = vmatpush1.msra.mxu0 %v204
  %254 = vmatprep.subr.mxu0 0.0
  %255 = vmatpush1.msra.mxu0 %v205
  %256 = vmatprep.subr.mxu0 0.0
  %257 = vmatpush1.msra.mxu0 %v206
  %258 = vmatprep.subr.mxu0 0.0
  %259 = vmatpush1.msra.mxu0 %v207
  %260 = vmatprep.subr.mxu0 0.0
  %261 = vmatpush1.msra.mxu0 %v208
  %262 = vmatprep.subr.mxu0 0.0
  %263 = vmatpush1.msra.mxu0 %v209
  %264 = vmatprep.subr.mxu0 0.0
  %265 = vmatpush1.msra.mxu0 %v210
  %266 = vmatprep.subr.mxu0 0.0
  %267 = vmatpush1.msra.mxu0 %v211
  %268 = vmatprep.subr.mxu0 0.0
  %269 = vmatpush1.msra.mxu0 %v212
  %270 = vmatprep.subr.mxu0 0.0
  %271 = vmatpush1.msra.mxu0 %v213
  %272 = vmatprep.subr.mxu0 0.0
  %273 = vmatpush1.msra.mxu0 %v214
  %274 = vmatprep.subr.mxu0 0.0
  %275 = vmatpush1.msra.mxu0 %v215
  %276 = vmatprep.subr.mxu0 0.0
  %277 = vmatpush1.msra.mxu0 %v216
  %278 = vmatprep.subr.mxu0 0.0
  %279 = vmatpush1.msra.mxu0 %v217
  %280 = vmatprep.subr.mxu0 0.0
  %281 = vmatpush1.msra.mxu0 %v218
  %282 = vmatprep.subr.mxu0 0.0
  %283 = vmatpush1.msra.mxu0 %v219
  %284 = vmatprep.mubr.f32.mxu0 %v141
  %285 = vmatmul.mubr.f32.gmra.mrb[0].mxu0 %v140
  %v286 = vpop.f32.mrb[0].mxu0
  %v287 = vadd.f32 0.0, %v286
  %v288 = vpop.f32.mrb[0].mxu0
  %289 = vmatprep.mubr.f32.mxu0 %v143
  %290 = vmatmul.mubr.f32.gmra.mrb[0].mxu0 %v142
  %v291 = vpop.f32.mrb[0].mxu0
  %v292 = vadd.f32 0.0, %v291
  %v293 = vpop.f32.mrb[0].mxu0
  %294 = vmatprep.mubr.f32.mxu0 %v145
  %295 = vmatmul.mubr.f32.gmra.mrb[0].mxu0 %v144
  %v296 = vpop.f32.mrb[0].mxu0
  %v297 = vadd.f32 0.0, %v296
  %v298 = vpop.f32.mrb[0].mxu0
  %299 = vmatprep.mubr.f32.mxu0 %v147
  %300 = vmatmul.mubr.f32.gmra.mrb[0].mxu0 %v146
  %v301 = vpop.f32.mrb[0].mxu0
  %v302 = vadd.f32 0.0, %v301
  %v303 = vpop.f32.mrb[0].mxu0
  %304 = vmatprep.mubr.f32.mxu0 %v149
  %305 = vmatmul.mubr.f32.gmra.mrb[0].mxu0 %v148
  %v306 = vpop.f32.mrb[0].mxu0
  %v307 = vadd.f32 0.0, %v306
  %v308 = vpop.f32.mrb[0].mxu0
  %309 = vmatprep.mubr.f32.mxu0 %v151
  %310 = vmatmul.mubr.f32.gmra.mrb[0].mxu0 %v150
  %v311 = vpop.f32.mrb[0].mxu0
  %v312 = vadd.f32 0.0, %v311
  %v313 = vpop.f32.mrb[0].mxu0
  %314 = vmatprep.mubr.f32.mxu0 %v153
  %315 = vmatmul.mubr.f32.gmra.mrb[0].mxu0 %v152
  %v316 = vpop.f32.mrb[0].mxu0
  %v317 = vadd.f32 0.0, %v316
  %v318 = vpop.f32.mrb[0].mxu0
  %319 = vmatprep.mubr.f32.mxu0 %v155
  %320 = vmatmul.mubr.f32.gmra.mrb[0].mxu0 %v154
  %v321 = vpop.f32.mrb[0].mxu0
  %v322 = vadd.f32 0.0, %v321
  %v323 = vpop.f32.mrb[0].mxu0
  %324 = vmatprep.mubr.f32.mxu0 %v157
  %325 = vmatmul.mubr.f32.gmra.mrb[0].mxu0 %v156
  %v326 = vpop.f32.mrb[0].mxu0
  %v327 = vadd.f32 0.0, %v326
  %v328 = vpop.f32.mrb[0].mxu0
  %329 = vmatprep.mubr.f32.mxu0 %v159
  %330 = vmatmul.mubr.f32.gmra.mrb[0].mxu0 %v158
  %v331 = vpop.f32.mrb[0].mxu0
  %v332 = vadd.f32 0.0, %v331
  %v333 = vpop.f32.mrb[0].mxu0
  %334 = vmatprep.mubr.f32.mxu0 %v161
  %335 = vmatmul.mubr.f32.gmra.mrb[0].mxu0 %v160
  %v336 = vpop.f32.mrb[0].mxu0
  %v337 = vadd.f32 0.0, %v336
  %v338 = vpop.f32.mrb[0].mxu0
  %339 = vmatprep.mubr.f32.mxu0 %v163
  %340 = vmatmul.mubr.f32.gmra.mrb[0].mxu0 %v162
  %v341 = vpop.f32.mrb[0].mxu0
  %v342 = vadd.f32 0.0, %v341
  %v343 = vpop.f32.mrb[0].mxu0
  %344 = vmatprep.mubr.f32.mxu0 %v165
  %345 = vmatmul.mubr.f32.gmra.mrb[0].mxu0 %v164
  %v346 = vpop.f32.mrb[0].mxu0
  %v347 = vadd.f32 0.0, %v346
  %v348 = vpop.f32.mrb[0].mxu0
  %349 = vmatprep.mubr.f32.mxu0 %v167
  %350 = vmatmul.mubr.f32.gmra.mrb[0].mxu0 %v166
  %v351 = vpop.f32.mrb[0].mxu0
  %v352 = vadd.f32 0.0, %v351
  %v353 = vpop.f32.mrb[0].mxu0
  %354 = vmatprep.mubr.f32.mxu0 %v169
  %355 = vmatmul.mubr.f32.gmra.mrb[0].mxu0 %v168
  %v356 = vpop.f32.mrb[0].mxu0
  %v357 = vadd.f32 0.0, %v356
  %v358 = vpop.f32.mrb[0].mxu0
  %359 = vmatprep.mubr.f32.mxu0 %v171
  %360 = vmatmul.mubr.f32.gmra.mrb[0].mxu0 %v170
  %v361 = vpop.f32.mrb[0].mxu0
  %v362 = vadd.f32 0.0, %v361
  %v363 = vpop.f32.mrb[0].mxu0
  %364 = vdwg.mxu0
  %v365 = vadd.f32 %v172, %v287
  %v366 = vadd.f32 %v173, %v292
  %v367 = vadd.f32 %v174, %v297
  %v368 = vadd.f32 %v175, %v302
  %v369 = vadd.f32 %v176, %v307
  %v370 = vadd.f32 %v177, %v312
  %v371 = vadd.f32 %v178, %v317
  %v372 = vadd.f32 %v179, %v322
  %v373 = vadd.f32 %v180, %v327
  %v374 = vadd.f32 %v181, %v332
  %v375 = vadd.f32 %v182, %v337
  %v376 = vadd.f32 %v183, %v342
  %v377 = vadd.f32 %v184, %v347
  %v378 = vadd.f32 %v185, %v352
  %v379 = vadd.f32 %v186, %v357
  %v380 = vadd.f32 %v187, %v362
  %vm381 = vcmask 56320
  %382 = vst.msk [vmem:[#allocation2] sm:$0xff] %vm381, %v365
  %383 = vst.msk [vmem:[#allocation2 + $0x8] sm:$0xff] %vm381, %v366
  %384 = vst.msk [vmem:[#allocation2 + $0x10] sm:$0xff] %vm381, %v367
  %385 = vst.msk [vmem:[#allocation2 + $0x18] sm:$0xff] %vm381, %v368
  %386 = vst.msk [vmem:[#allocation2 + $0x20] sm:$0xff] %vm381, %v369
  %387 = vst.msk [vmem:[#allocation2 + $0x28] sm:$0xff] %vm381, %v370
  %388 = vst.msk [vmem:[#allocation2 + $0x30] sm:$0xff] %vm381, %v371
  %389 = vst.msk [vmem:[#allocation2 + $0x38] sm:$0xff] %vm381, %v372
  %390 = vst.msk [vmem:[#allocation2 + $0x40] sm:$0xff] %vm381, %v373
  %391 = vst.msk [vmem:[#allocation2 + $0x48] sm:$0xff] %vm381, %v374
  %392 = vst.msk [vmem:[#allocation2 + $0x50] sm:$0xff] %vm381, %v375
  %393 = vst.msk [vmem:[#allocation2 + $0x58] sm:$0xff] %vm381, %v376
  %394 = vst.msk [vmem:[#allocation2 + $0x60] sm:$0xff] %vm381, %v377
  %395 = vst.msk [vmem:[#allocation2 + $0x68] sm:$0xff] %vm381, %v378
  %396 = vst.msk [vmem:[#allocation2 + $0x70] sm:$0xff] %vm381, %v379
  %397 = vst.msk [vmem:[#allocation2 + $0x78] sm:$0xff] %vm381, %v380
  // Predicated region
  $region14: #{model_forward.3} parent=0 // pred_check
    %p398 = pneg %p11
  $region15: #{model_forward.3} parent=0 // pred_check_branch
    %400 = sbr.rel (%p398) target = $region17
  $region16: #{model_forward.3} parent=0 // pred_region
    %v401 = vld [vmem:[#allocation2] sm:$0xff]
    %v402 = vld [vmem:[#allocation2 + $0x8] sm:$0xff]
    %v403 = vld [vmem:[#allocation2 + $0x10] sm:$0xff]
    %v404 = vld [vmem:[#allocation2 + $0x18] sm:$0xff]
    %v405 = vld [vmem:[#allocation2 + $0x20] sm:$0xff]
    %v406 = vld [vmem:[#allocation2 + $0x28] sm:$0xff]
    %v407 = vld [vmem:[#allocation2 + $0x30] sm:$0xff]
    %v408 = vld [vmem:[#allocation2 + $0x38] sm:$0xff]
    %v409 = vld [vmem:[#allocation2 + $0x40] sm:$0xff]
    %v410 = vld [vmem:[#allocation2 + $0x48] sm:$0xff]
    %v411 = vld [vmem:[#allocation2 + $0x50] sm:$0xff]
    %v412 = vld [vmem:[#allocation2 + $0x58] sm:$0xff]
    %v413 = vld [vmem:[#allocation2 + $0x60] sm:$0xff]
    %v414 = vld [vmem:[#allocation2 + $0x68] sm:$0xff]
    %v415 = vld [vmem:[#allocation2 + $0x70] sm:$0xff]
    %v416 = vld [vmem:[#allocation2 + $0x78] sm:$0xff]
    %v417 = vmax.f32 %v401, 1.0
    %v418 = vmax.f32 %v402, 1.0
    %v419 = vmax.f32 %v403, 1.0
    %v420 = vmax.f32 %v404, 1.0
    %v421 = vmax.f32 %v405, 1.0
    %v422 = vmax.f32 %v406, 1.0
    %v423 = vmax.f32 %v407, 1.0
    %v424 = vmax.f32 %v408, 1.0
    %v425 = vmax.f32 %v409, 1.0
    %v426 = vmax.f32 %v410, 1.0
    %v427 = vmax.f32 %v411, 1.0
    %v428 = vmax.f32 %v412, 1.0
    %v429 = vmax.f32 %v413, 1.0
    %v430 = vmax.f32 %v414, 1.0
    %v431 = vmax.f32 %v415, 1.0
    %v432 = vmax.f32 %v416, 1.0
    %434 = vset.pattern.permute.xlu0 6
    %435 = vperm.xlu0 %434, %v417
    %v436 = vpop.permute.xlu0 %435
    %439 = vset.pattern.permute.xlu0 6
    %440 = vperm.xlu0 %439, %v418
    %v441 = vpop.permute.xlu0 %440
    %444 = vset.pattern.permute.xlu0 6
    %445 = vperm.xlu0 %444, %v419
    %v446 = vpop.permute.xlu0 %445
    %449 = vset.pattern.permute.xlu0 6
    %450 = vperm.xlu0 %449, %v420
    %v451 = vpop.permute.xlu0 %450
    %454 = vset.pattern.permute.xlu0 6
    %455 = vperm.xlu0 %454, %v421
    %v456 = vpop.permute.xlu0 %455
    %459 = vset.pattern.permute.xlu0 6
    %460 = vperm.xlu0 %459, %v422
    %v461 = vpop.permute.xlu0 %460
    %464 = vset.pattern.permute.xlu0 6
    %465 = vperm.xlu0 %464, %v423
    %v466 = vpop.permute.xlu0 %465
    %469 = vset.pattern.permute.xlu0 6
    %470 = vperm.xlu0 %469, %v424
    %v471 = vpop.permute.xlu0 %470
    %474 = vset.pattern.permute.xlu0 6
    %475 = vperm.xlu0 %474, %v425
    %v476 = vpop.permute.xlu0 %475
    %479 = vset.pattern.permute.xlu0 6
    %480 = vperm.xlu0 %479, %v426
    %v481 = vpop.permute.xlu0 %480
    %484 = vset.pattern.permute.xlu0 6
    %485 = vperm.xlu0 %484, %v427
    %v486 = vpop.permute.xlu0 %485
    %489 = vset.pattern.permute.xlu0 6
    %490 = vperm.xlu0 %489, %v428
    %v491 = vpop.permute.xlu0 %490
    %494 = vset.pattern.permute.xlu0 6
    %495 = vperm.xlu0 %494, %v429
    %v496 = vpop.permute.xlu0 %495
    %499 = vset.pattern.permute.xlu0 6
    %500 = vperm.xlu0 %499, %v430
    %v501 = vpop.permute.xlu0 %500
    %504 = vset.pattern.permute.xlu0 6
    %505 = vperm.xlu0 %504, %v431
    %v506 = vpop.permute.xlu0 %505
    %509 = vset.pattern.permute.xlu0 6
    %510 = vperm.xlu0 %509, %v432
    %v511 = vpop.permute.xlu0 %510
    %v513 = vrcp.pop %v436
    %v514 = vmul.f32 %v401, %v513
    %v515 = vrcp.pop %v441
    %v516 = vmul.f32 %v402, %v515
    %v517 = vrcp.pop %v446
    %v518 = vmul.f32 %v403, %v517
    %v519 = vrcp.pop %v451
    %v520 = vmul.f32 %v404, %v519
    %v521 = vrcp.pop %v456
    %v522 = vmul.f32 %v405, %v521
    %v523 = vrcp.pop %v461
    %v524 = vmul.f32 %v406, %v523
    %v525 = vrcp.pop %v466
    %v526 = vmul.f32 %v407, %v525
    %v527 = vrcp.pop %v471
    %v528 = vmul.f32 %v408, %v527
    %v529 = vrcp.pop %v476
    %v530 = vmul.f32 %v409, %v529
    %v531 = vrcp.pop %v481
    %v532 = vmul.f32 %v410, %v531
    %v533 = vrcp.pop %v486
    %v534 = vmul.f32 %v411, %v533
    %v535 = vrcp.pop %v491
    %v536 = vmul.f32 %v412, %v535
    %v537 = vrcp.pop %v496
    %v538 = vmul.f32 %v413, %v537
    %v539 = vrcp.pop %v501
    %v540 = vmul.f32 %v414, %v539
    %v541 = vrcp.pop %v506
    %v542 = vmul.f32 %v415, %v541
    %v543 = vrcp.pop %v511
    %v544 = vmul.f32 %v416, %v543
    %545 = vst.msk [vmem:[%s2] sm:$0xff] %vm381, %v514
    %546 = vst.msk [vmem:[%s2 + $0x8] sm:$0xff] %vm381, %v516
    %547 = vst.msk [vmem:[%s2 + $0x10] sm:$0xff] %vm381, %v518
    %548 = vst.msk [vmem:[%s2 + $0x18] sm:$0xff] %vm381, %v520
    %549 = vst.msk [vmem:[%s2 + $0x20] sm:$0xff] %vm381, %v522
    %550 = vst.msk [vmem:[%s2 + $0x28] sm:$0xff] %vm381, %v524
    %551 = vst.msk [vmem:[%s2 + $0x30] sm:$0xff] %vm381, %v526
    %552 = vst.msk [vmem:[%s2 + $0x38] sm:$0xff] %vm381, %v528
    %553 = vst.msk [vmem:[%s2 + $0x40] sm:$0xff] %vm381, %v530
    %554 = vst.msk [vmem:[%s2 + $0x48] sm:$0xff] %vm381, %v532
    %555 = vst.msk [vmem:[%s2 + $0x50] sm:$0xff] %vm381, %v534
    %556 = vst.msk [vmem:[%s2 + $0x58] sm:$0xff] %vm381, %v536
    %557 = vst.msk [vmem:[%s2 + $0x60] sm:$0xff] %vm381, %v538
    %558 = vst.msk [vmem:[%s2 + $0x68] sm:$0xff] %vm381, %v540
    %559 = vst.msk [vmem:[%s2 + $0x70] sm:$0xff] %vm381, %v542
    %560 = vst.msk [vmem:[%s2 + $0x78] sm:$0xff] %vm381, %v544
  $region17: #{model_forward.3} parent=0 // pred_fallthru
    _
  // Predicated region
  $region18: #{model_forward.3} parent=0 // pred_check
    _
  $region19: #{model_forward.3} parent=0 // pred_check_branch
    %562 = sbr.rel (0) target = $region21
  $region20: #{model_forward.3} parent=0 // pred_region
    _
  $region21: #{model_forward.3} parent=0 // pred_fallthru
    _
  // Predicated region
  $region22: #{model_forward.3} parent=0 // pred_check
    _
  $region23: #{model_forward.3} parent=0 // pred_check_branch
    %564 = sbr.rel (0) target = $region25
  $region24: #{model_forward.3} parent=0 // pred_region
    _
  $region25: #{model_forward.3} parent=0 // pred_fallthru
    _

// kernel: model_forward.4
$region0: #{model_forward.4}
  #allocation0 [shape = 'u32[]', space=smem, size = 0x4, offset = 0x4, fixed_abs, tag = 'smem constant byte address 0x4 - core index']
  #allocation1 [shape = 'u32[144,128]{1,0:T(1,128)}', space=vmem, size = 0x12000, scoped, tag = 'internal scratch']
  %s0 = inlined_call_operand.vmem [shape: f32[128,216], index: 0, kind: input, shape index: {}]
  %s1 = inlined_call_operand.vmem [shape: f32[216,32], index: 1, kind: input, shape index: {}]
  %s2 = inlined_call_operand.vmem [shape: f32[1,32], index: 2, kind: input, shape index: {}]
  %s3 = inlined_call_operand.vmem [shape: f32[1,32], index: 3, kind: input, shape index: {}]
  %s4 = inlined_call_operand.vmem [shape: f32[128,32], index: 4, kind: output, shape index: {}]
  %s5 = sld [smem:[#allocation0]]
  $region26: #{model_forward.4} parent=0
    _
  %s7 = ssub.s32 1, %s5
  %s8 = scalar_select 0, %s7, %s5
  // Predicated region
  $region2: #{model_forward.4} parent=0 // pred_check
    _
  $region3: #{model_forward.4} parent=0 // pred_check_branch
    %10 = sbr.rel (0) target = $region5
  $region4: #{model_forward.4} parent=0 // pred_region
    _
  $region5: #{model_forward.4} parent=0 // pred_fallthru
    _
  // Predicated region
  $region6: #{model_forward.4} parent=0 // pred_check
    _
  $region7: #{model_forward.4} parent=0 // pred_check_branch
    %12 = sbr.rel (0) target = $region9
  $region8: #{model_forward.4} parent=0 // pred_region
    _
  $region9: #{model_forward.4} parent=0 // pred_fallthru
    _
  // Predicated region
  $region10: #{model_forward.4} parent=0 // pred_check
    _
  $region11: #{model_forward.4} parent=0 // pred_check_branch
    %14 = sbr.rel (0) target = $region13
  $region12: #{model_forward.4} parent=0 // pred_region
    _
  $region13: #{model_forward.4} parent=0 // pred_fallthru
    _
  // Predicated region
  $region14: #{model_forward.4} parent=0 // pred_check
    _
  $region15: #{model_forward.4} parent=0 // pred_check_branch
    %16 = sbr.rel (0) target = $region17
  $region16: #{model_forward.4} parent=0 // pred_region
    _
  $region17: #{model_forward.4} parent=0 // pred_fallthru
    _
  %v17 = vld [vmem:[%s0] sm:$0xff]
  %v18 = vld [vmem:[%s0 + $0x8] sm:$0xff]
  %v19 = vld [vmem:[%s0 + $0x10] sm:$0xff]
  %v20 = vld [vmem:[%s0 + $0x18] sm:$0xff]
  %v21 = vld [vmem:[%s0 + $0x20] sm:$0xff]
  %v22 = vld [vmem:[%s0 + $0x28] sm:$0xff]
  %v23 = vld [vmem:[%s0 + $0x30] sm:$0xff]
  %v24 = vld [vmem:[%s0 + $0x38] sm:$0xff]
  %v25 = vld [vmem:[%s0 + $0x40] sm:$0xff]
  %v26 = vld [vmem:[%s0 + $0x48] sm:$0xff]
  %v27 = vld [vmem:[%s0 + $0x50] sm:$0xff]
  %v28 = vld [vmem:[%s0 + $0x58] sm:$0xff]
  %v29 = vld [vmem:[%s0 + $0x60] sm:$0xff]
  %v30 = vld [vmem:[%s0 + $0x68] sm:$0xff]
  %v31 = vld [vmem:[%s0 + $0x70] sm:$0xff]
  %v32 = vld [vmem:[%s0 + $0x78] sm:$0xff]
  %v33 = vld [vmem:[%s0 + $0x80] sm:$0xff]
  %v34 = vld [vmem:[%s0 + $0x88] sm:$0xff]
  %v35 = vld [vmem:[%s0 + $0x90] sm:$0xff]
  %v36 = vld [vmem:[%s0 + $0x98] sm:$0xff]
  %v37 = vld [vmem:[%s0 + $0xa0] sm:$0xff]
  %v38 = vld [vmem:[%s0 + $0xa8] sm:$0xff]
  %v39 = vld [vmem:[%s0 + $0xb0] sm:$0xff]
  %v40 = vld [vmem:[%s0 + $0xb8] sm:$0xff]
  %v41 = vld [vmem:[%s0 + $0xc0] sm:$0xff]
  %v42 = vld [vmem:[%s0 + $0xc8] sm:$0xff]
  %v43 = vld [vmem:[%s0 + $0xd0] sm:$0xff]
  %v44 = vld [vmem:[%s0 + $0xd8] sm:$0xff]
  %v45 = vld [vmem:[%s0 + $0xe0] sm:$0xff]
  %v46 = vld [vmem:[%s0 + $0xe8] sm:$0xff]
  %v47 = vld [vmem:[%s0 + $0xf0] sm:$0xff]
  %v48 = vld [vmem:[%s0 + $0xf8] sm:$0xff]
  %v49 = vld [vmem:[%s1] sm:$0xff]
  %v50 = vld [vmem:[%s1 + $0x8] sm:$0xff]
  %v51 = vld [vmem:[%s1 + $0x10] sm:$0xff]
  %v52 = vld [vmem:[%s1 + $0x18] sm:$0xff]
  %v53 = vld [vmem:[%s1 + $0x20] sm:$0xff]
  %v54 = vld [vmem:[%s1 + $0x28] sm:$0xff]
  %v55 = vld [vmem:[%s1 + $0x30] sm:$0xff]
  %v56 = vld [vmem:[%s1 + $0x38] sm:$0xff]
  %v57 = vld [vmem:[%s1 + $0x40] sm:$0xff]
  %v58 = vld [vmem:[%s1 + $0x48] sm:$0xff]
  %v59 = vld [vmem:[%s1 + $0x50] sm:$0xff]
  %v60 = vld [vmem:[%s1 + $0x58] sm:$0xff]
  %v61 = vld [vmem:[%s1 + $0x60] sm:$0xff]
  %v62 = vld [vmem:[%s1 + $0x68] sm:$0xff]
  %v63 = vld [vmem:[%s1 + $0x70] sm:$0xff]
  %v64 = vld [vmem:[%s1 + $0x78] sm:$0xff]
  %v65 = vld [vmem:[%s1 + $0x80] sm:$0xff]
  %v66 = vld [vmem:[%s1 + $0x88] sm:$0xff]
  %v67 = vld [vmem:[%s1 + $0x90] sm:$0xff]
  %v68 = vld [vmem:[%s1 + $0x98] sm:$0xff]
  %v69 = vld [vmem:[%s1 + $0xa0] sm:$0xff]
  %v70 = vld [vmem:[%s1 + $0xa8] sm:$0xff]
  %v71 = vld [vmem:[%s1 + $0xb0] sm:$0xff]
  %v72 = vld [vmem:[%s1 + $0xb8] sm:$0xff]
  %v73 = vld [vmem:[%s1 + $0xc0] sm:$0xff]
  %v74 = vld [vmem:[%s1 + $0xc8] sm:$0xff]
  %v75 = vld [vmem:[%s1 + $0xd0] sm:$0xff]
  %vm76 = vcmask 719872
  %v78 = vsel %vm76, %v18, 0
  %v81 = vsel %vm76, %v20, 0
  %v84 = vsel %vm76, %v22, 0
  %v87 = vsel %vm76, %v24, 0
  %v90 = vsel %vm76, %v26, 0
  %v93 = vsel %vm76, %v28, 0
  %v96 = vsel %vm76, %v30, 0
  %v99 = vsel %vm76, %v32, 0
  %v102 = vsel %vm76, %v34, 0
  %v105 = vsel %vm76, %v36, 0
  %v108 = vsel %vm76, %v38, 0
  %v111 = vsel %vm76, %v40, 0
  %v114 = vsel %vm76, %v42, 0
  %v117 = vsel %vm76, %v44, 0
  %v120 = vsel %vm76, %v46, 0
  %v123 = vsel %vm76, %v48, 0
  %125 = vmatprep.subr.mxu0 0.0
  %126 = vmatpush1.msra.mxu0 %v49
  %127 = vmatprep.subr.mxu0 0.0
  %128 = vmatpush1.msra.mxu0 %v50
  %129 = vmatprep.subr.mxu0 0.0
  %130 = vmatpush1.msra.mxu0 %v51
  %131 = vmatprep.subr.mxu0 0.0
  %132 = vmatpush1.msra.mxu0 %v52
  %133 = vmatprep.subr.mxu0 0.0
  %134 = vmatpush1.msra.mxu0 %v53
  %135 = vmatprep.subr.mxu0 0.0
  %136 = vmatpush1.msra.mxu0 %v54
  %137 = vmatprep.subr.mxu0 0.0
  %138 = vmatpush1.msra.mxu0 %v55
  %139 = vmatprep.subr.mxu0 0.0
  %140 = vmatpush1.msra.mxu0 %v56
  %141 = vmatprep.subr.mxu0 0.0
  %142 = vmatpush1.msra.mxu0 %v57
  %143 = vmatprep.subr.mxu0 0.0
  %144 = vmatpush1.msra.mxu0 %v58
  %145 = vmatprep.subr.mxu0 0.0
  %146 = vmatpush1.msra.mxu0 %v59
  %147 = vmatprep.subr.mxu0 0.0
  %148 = vmatpush1.msra.mxu0 %v60
  %149 = vmatprep.subr.mxu0 0.0
  %150 = vmatpush1.msra.mxu0 %v61
  %151 = vmatprep.subr.mxu0 0.0
  %152 = vmatpush1.msra.mxu0 %v62
  %153 = vmatprep.subr.mxu0 0.0
  %154 = vmatpush1.msra.mxu0 %v63
  %155 = vmatprep.subr.mxu0 0.0
  %156 = vmatpush1.msra.mxu0 %v64
  %157 = vmatprep.subr.mxu0 0.0
  %158 = vmatpush1.msra.mxu0 %v65
  %159 = vmatprep.subr.mxu0 0.0
  %160 = vmatpush1.msra.mxu0 %v66
  %161 = vmatprep.subr.mxu0 0.0
  %162 = vmatpush1.msra.mxu0 %v67
  %163 = vmatprep.subr.mxu0 0.0
  %164 = vmatpush1.msra.mxu0 %v68
  %165 = vmatprep.subr.mxu0 0.0
  %166 = vmatpush1.msra.mxu0 %v69
  %167 = vmatprep.subr.mxu0 0.0
  %168 = vmatpush1.msra.mxu0 %v70
  %169 = vmatprep.subr.mxu0 0.0
  %170 = vmatpush1.msra.mxu0 %v71
  %171 = vmatprep.subr.mxu0 0.0
  %172 = vmatpush1.msra.mxu0 %v72
  %173 = vmatprep.subr.mxu0 0.0
  %174 = vmatpush1.msra.mxu0 %v73
  %175 = vmatprep.subr.mxu0 0.0
  %176 = vmatpush1.msra.mxu0 %v74
  %177 = vmatprep.subr.mxu0 0.0
  %178 = vmatpush1.msra.mxu0 %v75
  %179 = vmatprep.subr.mxu0 0.0
  %180 = vmatpush1.msra.mxu0 0.0
  %181 = vmatprep.subr.mxu0 0.0
  %182 = vmatpush1.msra.mxu0 0.0
  %183 = vmatprep.subr.mxu0 0.0
  %184 = vmatpush1.msra.mxu0 0.0
  %185 = vmatprep.subr.mxu0 0.0
  %186 = vmatpush1.msra.mxu0 0.0
  %187 = vmatprep.subr.mxu0 0.0
  %188 = vmatpush1.msra.mxu0 0.0
  %189 = vmatprep.mubr.f32.mxu0 %v78
  %190 = vmatmul.mubr.f32.gmra.mrb[0].mxu0 %v17
  %v191 = vpop.f32.mrb[0].mxu0
  %v192 = vadd.f32 0.0, %v191
  %v193 = vpop.f32.mrb[0].mxu0
  %194 = vmatprep.mubr.f32.mxu0 %v81
  %195 = vmatmul.mubr.f32.gmra.mrb[0].mxu0 %v19
  %v196 = vpop.f32.mrb[0].mxu0
  %v197 = vadd.f32 0.0, %v196
  %v198 = vpop.f32.mrb[0].mxu0
  %199 = vmatprep.mubr.f32.mxu0 %v84
  %200 = vmatmul.mubr.f32.gmra.mrb[0].mxu0 %v21
  %v201 = vpop.f32.mrb[0].mxu0
  %v202 = vadd.f32 0.0, %v201
  %v203 = vpop.f32.mrb[0].mxu0
  %204 = vmatprep.mubr.f32.mxu0 %v87
  %205 = vmatmul.mubr.f32.gmra.mrb[0].mxu0 %v23
  %v206 = vpop.f32.mrb[0].mxu0
  %v207 = vadd.f32 0.0, %v206
  %v208 = vpop.f32.mrb[0].mxu0
  %209 = vmatprep.mubr.f32.mxu0 %v90
  %210 = vmatmul.mubr.f32.gmra.mrb[0].mxu0 %v25
  %v211 = vpop.f32.mrb[0].mxu0
  %v212 = vadd.f32 0.0, %v211
  %v213 = vpop.f32.mrb[0].mxu0
  %214 = vmatprep.mubr.f32.mxu0 %v93
  %215 = vmatmul.mubr.f32.gmra.mrb[0].mxu0 %v27
  %v216 = vpop.f32.mrb[0].mxu0
  %v217 = vadd.f32 0.0, %v216
  %v218 = vpop.f32.mrb[0].mxu0
  %219 = vmatprep.mubr.f32.mxu0 %v96
  %220 = vmatmul.mubr.f32.gmra.mrb[0].mxu0 %v29
  %v221 = vpop.f32.mrb[0].mxu0
  %v222 = vadd.f32 0.0, %v221
  %v223 = vpop.f32.mrb[0].mxu0
  %224 = vmatprep.mubr.f32.mxu0 %v99
  %225 = vmatmul.mubr.f32.gmra.mrb[0].mxu0 %v31
  %v226 = vpop.f32.mrb[0].mxu0
  %v227 = vadd.f32 0.0, %v226
  %v228 = vpop.f32.mrb[0].mxu0
  %229 = vmatprep.mubr.f32.mxu0 %v102
  %230 = vmatmul.mubr.f32.gmra.mrb[0].mxu0 %v33
  %v231 = vpop.f32.mrb[0].mxu0
  %v232 = vadd.f32 0.0, %v231
  %v233 = vpop.f32.mrb[0].mxu0
  %234 = vmatprep.mubr.f32.mxu0 %v105
  %235 = vmatmul.mubr.f32.gmra.mrb[0].mxu0 %v35
  %v236 = vpop.f32.mrb[0].mxu0
  %v237 = vadd.f32 0.0, %v236
  %v238 = vpop.f32.mrb[0].mxu0
  %239 = vmatprep.mubr.f32.mxu0 %v108
  %240 = vmatmul.mubr.f32.gmra.mrb[0].mxu0 %v37
  %v241 = vpop.f32.mrb[0].mxu0
  %v242 = vadd.f32 0.0, %v241
  %v243 = vpop.f32.mrb[0].mxu0
  %244 = vmatprep.mubr.f32.mxu0 %v111
  %245 = vmatmul.mubr.f32.gmra.mrb[0].mxu0 %v39
  %v246 = vpop.f32.mrb[0].mxu0
  %v247 = vadd.f32 0.0, %v246
  %v248 = vpop.f32.mrb[0].mxu0
  %249 = vmatprep.mubr.f32.mxu0 %v114
  %250 = vmatmul.mubr.f32.gmra.mrb[0].mxu0 %v41
  %v251 = vpop.f32.mrb[0].mxu0
  %v252 = vadd.f32 0.0, %v251
  %v253 = vpop.f32.mrb[0].mxu0
  %254 = vmatprep.mubr.f32.mxu0 %v117
  %255 = vmatmul.mubr.f32.gmra.mrb[0].mxu0 %v43
  %v256 = vpop.f32.mrb[0].mxu0
  %v257 = vadd.f32 0.0, %v256
  %v258 = vpop.f32.mrb[0].mxu0
  %259 = vmatprep.mubr.f32.mxu0 %v120
  %260 = vmatmul.mubr.f32.gmra.mrb[0].mxu0 %v45
  %v261 = vpop.f32.mrb[0].mxu0
  %v262 = vadd.f32 0.0, %v261
  %v263 = vpop.f32.mrb[0].mxu0
  %264 = vmatprep.mubr.f32.mxu0 %v123
  %265 = vmatmul.mubr.f32.gmra.mrb[0].mxu0 %v47
  %v266 = vpop.f32.mrb[0].mxu0
  %v267 = vadd.f32 0.0, %v266
  %v268 = vpop.f32.mrb[0].mxu0
  %269 = vdwg.mxu0
  %v270 = vld [vmem:[%s2] sm:$0x1]
  %v272 = vlaneseq
  %v273 = vshrl.u32 %v272, 7
  %v274 = vsub.s32 0, %v273
  %v275 = vrot.slane %v270, %v274
  %v277 = vmul.f32 %v192, %v275
  %v278 = vmul.f32 %v197, %v275
  %v279 = vmul.f32 %v202, %v275
  %v280 = vmul.f32 %v207, %v275
  %v281 = vmul.f32 %v212, %v275
  %v282 = vmul.f32 %v217, %v275
  %v283 = vmul.f32 %v222, %v275
  %v284 = vmul.f32 %v227, %v275
  %v285 = vmul.f32 %v232, %v275
  %v286 = vmul.f32 %v237, %v275
  %v287 = vmul.f32 %v242, %v275
  %v288 = vmul.f32 %v247, %v275
  %v289 = vmul.f32 %v252, %v275
  %v290 = vmul.f32 %v257, %v275
  %v291 = vmul.f32 %v262, %v275
  %v292 = vmul.f32 %v267, %v275
  %v293 = vld [vmem:[%s3] sm:$0x1]
  %v295 = vlaneseq
  %v296 = vshrl.u32 %v295, 7
  %v297 = vsub.s32 0, %v296
  %v298 = vrot.slane %v293, %v297
  %v300 = vadd.f32 %v277, %v298
  %v301 = vadd.f32 %v278, %v298
  %v302 = vadd.f32 %v279, %v298
  %v303 = vadd.f32 %v280, %v298
  %v304 = vadd.f32 %v281, %v298
  %v305 = vadd.f32 %v282, %v298
  %v306 = vadd.f32 %v283, %v298
  %v307 = vadd.f32 %v284, %v298
  %v308 = vadd.f32 %v285, %v298
  %v309 = vadd.f32 %v286, %v298
  %v310 = vadd.f32 %v287, %v298
  %v311 = vadd.f32 %v288, %v298
  %v312 = vadd.f32 %v289, %v298
  %v313 = vadd.f32 %v290, %v298
  %v314 = vadd.f32 %v291, %v298
  %v315 = vadd.f32 %v292, %v298
  %v316 = vmax.f32 %v300, 0.0
  %v317 = vmax.f32 %v301, 0.0
  %v318 = vmax.f32 %v302, 0.0
  %v319 = vmax.f32 %v303, 0.0
  %v320 = vmax.f32 %v304, 0.0
  %v321 = vmax.f32 %v305, 0.0
  %v322 = vmax.f32 %v306, 0.0
  %v323 = vmax.f32 %v307, 0.0
  %v324 = vmax.f32 %v308, 0.0
  %v325 = vmax.f32 %v309, 0.0
  %v326 = vmax.f32 %v310, 0.0
  %v327 = vmax.f32 %v311, 0.0
  %v328 = vmax.f32 %v312, 0.0
  %v329 = vmax.f32 %v313, 0.0
  %v330 = vmax.f32 %v314, 0.0
  %v331 = vmax.f32 %v315, 0.0
  %vm332 = vcmask 261120
  %333 = vst.msk [vmem:[%s4] sm:$0xff] %vm332, %v316
  %334 = vst.msk [vmem:[%s4 + $0x8] sm:$0xff] %vm332, %v317
  %335 = vst.msk [vmem:[%s4 + $0x10] sm:$0xff] %vm332, %v318
  %336 = vst.msk [vmem:[%s4 + $0x18] sm:$0xff] %vm332, %v319
  %337 = vst.msk [vmem:[%s4 + $0x20] sm:$0xff] %vm332, %v320
  %338 = vst.msk [vmem:[%s4 + $0x28] sm:$0xff] %vm332, %v321
  %339 = vst.msk [vmem:[%s4 + $0x30] sm:$0xff] %vm332, %v322
  %340 = vst.msk [vmem:[%s4 + $0x38] sm:$0xff] %vm332, %v323
  %341 = vst.msk [vmem:[%s4 + $0x40] sm:$0xff] %vm332, %v324
  %342 = vst.msk [vmem:[%s4 + $0x48] sm:$0xff] %vm332, %v325
  %343 = vst.msk [vmem:[%s4 + $0x50] sm:$0xff] %vm332, %v326
  %344 = vst.msk [vmem:[%s4 + $0x58] sm:$0xff] %vm332, %v327
  %345 = vst.msk [vmem:[%s4 + $0x60] sm:$0xff] %vm332, %v328
  %346 = vst.msk [vmem:[%s4 + $0x68] sm:$0xff] %vm332, %v329
  %347 = vst.msk [vmem:[%s4 + $0x70] sm:$0xff] %vm332, %v330
  %348 = vst.msk [vmem:[%s4 + $0x78] sm:$0xff] %vm332, %v331
  // Predicated region
  $region18: #{model_forward.4} parent=0 // pred_check
    _
  $region19: #{model_forward.4} parent=0 // pred_check_branch
    %350 = sbr.rel (0) target = $region21
  $region20: #{model_forward.4} parent=0 // pred_region
    _
  $region21: #{model_forward.4} parent=0 // pred_fallthru
    _
  // Predicated region
  $region22: #{model_forward.4} parent=0 // pred_check
    _
  $region23: #{model_forward.4} parent=0 // pred_check_branch
    %352 = sbr.rel (0) target = $region25
  $region24: #{model_forward.4} parent=0 // pred_region
    _
  $region25: #{model_forward.4} parent=0 // pred_fallthru
    _

// kernel: model_forward.5
$region0: #{model_forward.5}
  #allocation0 [shape = 'u32[]', space=smem, size = 0x4, offset = 0x4, fixed_abs, tag = 'smem constant byte address 0x4 - core index']
  #allocation1 [shape = 'u32[144,128]{1,0:T(1,128)}', space=vmem, size = 0x12000, scoped, tag = 'internal scratch']
  #allocation2 [shape = 'f32[64,36]{1,0:T(8,128)}', space=vmem, size = 0x8000, scoped, tag = 'scratch operand']
  %s0 = inlined_call_operand.vmem [shape: s32[1,256], index: 0, kind: input, shape index: {}]
  %s1 = inlined_call_operand.vmem [shape: f32[256,36], index: 1, kind: input, shape index: {}]
  %s2 = inlined_call_operand.vmem [shape: f32[64,36], index: 2, kind: output, shape index: {}]
  %s3 = sld [smem:[#allocation0]]
  $region26: #{model_forward.5} parent=0
    _
  %s5 = ssub.s32 1, %s3
  %s6 = scalar_select 0, %s5, %s3
  // Predicated region
  $region2: #{model_forward.5} parent=0 // pred_check
    _
  $region3: #{model_forward.5} parent=0 // pred_check_branch
    %8 = sbr.rel (0) target = $region5
  $region4: #{model_forward.5} parent=0 // pred_region
    _
  $region5: #{model_forward.5} parent=0 // pred_fallthru
    _
  // Predicated region
  $region6: #{model_forward.5} parent=0 // pred_check
    _
  $region7: #{model_forward.5} parent=0 // pred_check_branch
    %10 = sbr.rel (0) target = $region9
  $region8: #{model_forward.5} parent=0 // pred_region
    _
  $region9: #{model_forward.5} parent=0 // pred_fallthru
    _
  %p11 = scmp.eq.s32.totalorder 0, 0
  // Predicated region
  $region10: #{model_forward.5} parent=0 // pred_check
    %p12 = pneg %p11
  $region11: #{model_forward.5} parent=0 // pred_check_branch
    %14 = sbr.rel (%p12) target = $region13
  $region12: #{model_forward.5} parent=0 // pred_region
    %vm15 = vcmask 293888
    %16 = vst.msk [vmem:[#allocation2] sm:$0xff] %vm15, 0.0
    %17 = vst.msk [vmem:[#allocation2 + $0x8] sm:$0xff] %vm15, 0.0
    %18 = vst.msk [vmem:[#allocation2 + $0x10] sm:$0xff] %vm15, 0.0
    %19 = vst.msk [vmem:[#allocation2 + $0x18] sm:$0xff] %vm15, 0.0
    %20 = vst.msk [vmem:[#allocation2 + $0x20] sm:$0xff] %vm15, 0.0
    %21 = vst.msk [vmem:[#allocation2 + $0x28] sm:$0xff] %vm15, 0.0
    %22 = vst.msk [vmem:[#allocation2 + $0x30] sm:$0xff] %vm15, 0.0
    %23 = vst.msk [vmem:[#allocation2 + $0x38] sm:$0xff] %vm15, 0.0
  $region13: #{model_forward.5} parent=0 // pred_fallthru
    _
  %v24 = vld [vmem:[%s0] sm:$0x3]
  %v25 = vlaneseq
  %v26 = vshrl.u32 %v25, 7
  %v27 = vadd.s32 %v26, 8
  %v28 = vadd.s32 %v26, 16
  %v29 = vadd.s32 %v26, 24
  %v30 = vadd.s32 %v26, 32
  %v31 = vadd.s32 %v26, 40
  %v32 = vadd.s32 %v26, 48
  %v33 = vadd.s32 %v26, 56
  %s34 = smul.u32 0, 64
  %v35 = vstv %s34
  %v36 = vadd.s32 %v26, %v35
  %v37 = vadd.s32 %v27, %v35
  %v38 = vadd.s32 %v28, %v35
  %v39 = vadd.s32 %v29, %v35
  %v40 = vadd.s32 %v30, %v35
  %v41 = vadd.s32 %v31, %v35
  %v42 = vadd.s32 %v32, %v35
  %v43 = vadd.s32 %v33, %v35
  %v44 = vlaneseq
  %v45 = vshrl.u32 %v44, 7
  %v46 = vsub.s32 0, %v45
  %v47 = vrot.slane %v24, %v46
  %v48 = vlaneseq
  %v49 = vshrl.u32 %v48, 7
  %v50 = vsub.s32 1, %v49
  %v51 = vrot.slane %v24, %v50
  %vm52 = vcmp.eq.s32.totalorder %v36, %v47
  %vm53 = vcmp.eq.s32.totalorder %v36, %v51
  %vm54 = vcmp.eq.s32.totalorder %v37, %v47
  %vm55 = vcmp.eq.s32.totalorder %v37, %v51
  %vm56 = vcmp.eq.s32.totalorder %v38, %v47
  %vm57 = vcmp.eq.s32.totalorder %v38, %v51
  %vm58 = vcmp.eq.s32.totalorder %v39, %v47
  %vm59 = vcmp.eq.s32.totalorder %v39, %v51
  %vm60 = vcmp.eq.s32.totalorder %v40, %v47
  %vm61 = vcmp.eq.s32.totalorder %v40, %v51
  %vm62 = vcmp.eq.s32.totalorder %v41, %v47
  %vm63 = vcmp.eq.s32.totalorder %v41, %v51
  %vm64 = vcmp.eq.s32.totalorder %v42, %v47
  %vm65 = vcmp.eq.s32.totalorder %v42, %v51
  %vm66 = vcmp.eq.s32.totalorder %v43, %v47
  %vm67 = vcmp.eq.s32.totalorder %v43, %v51
  %v68 = vsel %vm52, 1, 0
  %v69 = vsel %vm53, 1, 0
  %v70 = vsel %vm54, 1, 0
  %v71 = vsel %vm55, 1, 0
  %v72 = vsel %vm56, 1, 0
  %v73 = vsel %vm57, 1, 0
  %v74 = vsel %vm58, 1, 0
  %v75 = vsel %vm59, 1, 0
  %v76 = vsel %vm60, 1, 0
  %v77 = vsel %vm61, 1, 0
  %v78 = vsel %vm62, 1, 0
  %v79 = vsel %vm63, 1, 0
  %v80 = vsel %vm64, 1, 0
  %v81 = vsel %vm65, 1, 0
  %v82 = vsel %vm66, 1, 0
  %v83 = vsel %vm67, 1, 0
  %v84 = vcvt.s32.f32 %v68
  %v85 = vcvt.s32.f32 %v69
  %v86 = vcvt.s32.f32 %v70
  %v87 = vcvt.s32.f32 %v71
  %v88 = vcvt.s32.f32 %v72
  %v89 = vcvt.s32.f32 %v73
  %v90 = vcvt.s32.f32 %v74
  %v91 = vcvt.s32.f32 %v75
  %v92 = vcvt.s32.f32 %v76
  %v93 = vcvt.s32.f32 %v77
  %v94 = vcvt.s32.f32 %v78
  %v95 = vcvt.s32.f32 %v79
  %v96 = vcvt.s32.f32 %v80
  %v97 = vcvt.s32.f32 %v81
  %v98 = vcvt.s32.f32 %v82
  %v99 = vcvt.s32.f32 %v83
  %v100 = vld [vmem:[#allocation2] sm:$0xff]
  %v101 = vld [vmem:[#allocation2 + $0x8] sm:$0xff]
  %v102 = vld [vmem:[#allocation2 + $0x10] sm:$0xff]
  %v103 = vld [vmem:[#allocation2 + $0x18] sm:$0xff]
  %v104 = vld [vmem:[#allocation2 + $0x20] sm:$0xff]
  %v105 = vld [vmem:[#allocation2 + $0x28] sm:$0xff]
  %v106 = vld [vmem:[#allocation2 + $0x30] sm:$0xff]
  %v107 = vld [vmem:[#allocation2 + $0x38] sm:$0xff]
  %v108 = vld [vmem:[%s1] sm:$0xff]
  %v109 = vld [vmem:[%s1 + $0x8] sm:$0xff]
  %v110 = vld [vmem:[%s1 + $0x10] sm:$0xff]
  %v111 = vld [vmem:[%s1 + $0x18] sm:$0xff]
  %v112 = vld [vmem:[%s1 + $0x20] sm:$0xff]
  %v113 = vld [vmem:[%s1 + $0x28] sm:$0xff]
  %v114 = vld [vmem:[%s1 + $0x30] sm:$0xff]
  %v115 = vld [vmem:[%s1 + $0x38] sm:$0xff]
  %v116 = vld [vmem:[%s1 + $0x40] sm:$0xff]
  %v117 = vld [vmem:[%s1 + $0x48] sm:$0xff]
  %v118 = vld [vmem:[%s1 + $0x50] sm:$0xff]
  %v119 = vld [vmem:[%s1 + $0x58] sm:$0xff]
  %v120 = vld [vmem:[%s1 + $0x60] sm:$0xff]
  %v121 = vld [vmem:[%s1 + $0x68] sm:$0xff]
  %v122 = vld [vmem:[%s1 + $0x70] sm:$0xff]
  %v123 = vld [vmem:[%s1 + $0x78] sm:$0xff]
  %v124 = vld [vmem:[%s1 + $0x80] sm:$0xff]
  %v125 = vld [vmem:[%s1 + $0x88] sm:$0xff]
  %v126 = vld [vmem:[%s1 + $0x90] sm:$0xff]
  %v127 = vld [vmem:[%s1 + $0x98] sm:$0xff]
  %v128 = vld [vmem:[%s1 + $0xa0] sm:$0xff]
  %v129 = vld [vmem:[%s1 + $0xa8] sm:$0xff]
  %v130 = vld [vmem:[%s1 + $0xb0] sm:$0xff]
  %v131 = vld [vmem:[%s1 + $0xb8] sm:$0xff]
  %v132 = vld [vmem:[%s1 + $0xc0] sm:$0xff]
  %v133 = vld [vmem:[%s1 + $0xc8] sm:$0xff]
  %v134 = vld [vmem:[%s1 + $0xd0] sm:$0xff]
  %v135 = vld [vmem:[%s1 + $0xd8] sm:$0xff]
  %v136 = vld [vmem:[%s1 + $0xe0] sm:$0xff]
  %v137 = vld [vmem:[%s1 + $0xe8] sm:$0xff]
  %v138 = vld [vmem:[%s1 + $0xf0] sm:$0xff]
  %v139 = vld [vmem:[%s1 + $0xf8] sm:$0xff]
  %140 = vmatprep.subr.mxu0 0.0
  %141 = vmatpush1.msra.mxu0 %v108
  %142 = vmatprep.subr.mxu0 0.0
  %143 = vmatpush1.msra.mxu0 %v109
  %144 = vmatprep.subr.mxu0 0.0
  %145 = vmatpush1.msra.mxu0 %v110
  %146 = vmatprep.subr.mxu0 0.0
  %147 = vmatpush1.msra.mxu0 %v111
  %148 = vmatprep.subr.mxu0 0.0
  %149 = vmatpush1.msra.mxu0 %v112
  %150 = vmatprep.subr.mxu0 0.0
  %151 = vmatpush1.msra.mxu0 %v113
  %152 = vmatprep.subr.mxu0 0.0
  %153 = vmatpush1.msra.mxu0 %v114
  %154 = vmatprep.subr.mxu0 0.0
  %155 = vmatpush1.msra.mxu0 %v115
  %156 = vmatprep.subr.mxu0 0.0
  %157 = vmatpush1.msra.mxu0 %v116
  %158 = vmatprep.subr.mxu0 0.0
  %159 = vmatpush1.msra.mxu0 %v117
  %160 = vmatprep.subr.mxu0 0.0
  %161 = vmatpush1.msra.mxu0 %v118
  %162 = vmatprep.subr.mxu0 0.0
  %163 = vmatpush1.msra.mxu0 %v119
  %164 = vmatprep.subr.mxu0 0.0
  %165 = vmatpush1.msra.mxu0 %v120
  %166 = vmatprep.subr.mxu0 0.0
  %167 = vmatpush1.msra.mxu0 %v121
  %168 = vmatprep.subr.mxu0 0.0
  %169 = vmatpush1.msra.mxu0 %v122
  %170 = vmatprep.subr.mxu0 0.0
  %171 = vmatpush1.msra.mxu0 %v123
  %172 = vmatprep.subr.mxu0 0.0
  %173 = vmatpush1.msra.mxu0 %v124
  %174 = vmatprep.subr.mxu0 0.0
  %175 = vmatpush1.msra.mxu0 %v125
  %176 = vmatprep.subr.mxu0 0.0
  %177 = vmatpush1.msra.mxu0 %v126
  %178 = vmatprep.subr.mxu0 0.0
  %179 = vmatpush1.msra.mxu0 %v127
  %180 = vmatprep.subr.mxu0 0.0
  %181 = vmatpush1.msra.mxu0 %v128
  %182 = vmatprep.subr.mxu0 0.0
  %183 = vmatpush1.msra.mxu0 %v129
  %184 = vmatprep.subr.mxu0 0.0
  %185 = vmatpush1.msra.mxu0 %v130
  %186 = vmatprep.subr.mxu0 0.0
  %187 = vmatpush1.msra.mxu0 %v131
  %188 = vmatprep.subr.mxu0 0.0
  %189 = vmatpush1.msra.mxu0 %v132
  %190 = vmatprep.subr.mxu0 0.0
  %191 = vmatpush1.msra.mxu0 %v133
  %192 = vmatprep.subr.mxu0 0.0
  %193 = vmatpush1.msra.mxu0 %v134
  %194 = vmatprep.subr.mxu0 0.0
  %195 = vmatpush1.msra.mxu0 %v135
  %196 = vmatprep.subr.mxu0 0.0
  %197 = vmatpush1.msra.mxu0 %v136
  %198 = vmatprep.subr.mxu0 0.0
  %199 = vmatpush1.msra.mxu0 %v137
  %200 = vmatprep.subr.mxu0 0.0
  %201 = vmatpush1.msra.mxu0 %v138
  %202 = vmatprep.subr.mxu0 0.0
  %203 = vmatpush1.msra.mxu0 %v139
  %204 = vmatprep.mubr.f32.mxu0 %v85
  %205 = vmatmul.mubr.f32.gmra.mrb[0].mxu0 %v84
  %v206 = vpop.f32.mrb[0].mxu0
  %v207 = vadd.f32 0.0, %v206
  %v208 = vpop.f32.mrb[0].mxu0
  %209 = vmatprep.mubr.f32.mxu0 %v87
  %210 = vmatmul.mubr.f32.gmra.mrb[0].mxu0 %v86
  %v211 = vpop.f32.mrb[0].mxu0
  %v212 = vadd.f32 0.0, %v211
  %v213 = vpop.f32.mrb[0].mxu0
  %214 = vmatprep.mubr.f32.mxu0 %v89
  %215 = vmatmul.mubr.f32.gmra.mrb[0].mxu0 %v88
  %v216 = vpop.f32.mrb[0].mxu0
  %v217 = vadd.f32 0.0, %v216
  %v218 = vpop.f32.mrb[0].mxu0
  %219 = vmatprep.mubr.f32.mxu0 %v91
  %220 = vmatmul.mubr.f32.gmra.mrb[0].mxu0 %v90
  %v221 = vpop.f32.mrb[0].mxu0
  %v222 = vadd.f32 0.0, %v221
  %v223 = vpop.f32.mrb[0].mxu0
  %224 = vmatprep.mubr.f32.mxu0 %v93
  %225 = vmatmul.mubr.f32.gmra.mrb[0].mxu0 %v92
  %v226 = vpop.f32.mrb[0].mxu0
  %v227 = vadd.f32 0.0, %v226
  %v228 = vpop.f32.mrb[0].mxu0
  %229 = vmatprep.mubr.f32.mxu0 %v95
  %230 = vmatmul.mubr.f32.gmra.mrb[0].mxu0 %v94
  %v231 = vpop.f32.mrb[0].mxu0
  %v232 = vadd.f32 0.0, %v231
  %v233 = vpop.f32.mrb[0].mxu0
  %234 = vmatprep.mubr.f32.mxu0 %v97
  %235 = vmatmul.mubr.f32.gmra.mrb[0].mxu0 %v96
  %v236 = vpop.f32.mrb[0].mxu0
  %v237 = vadd.f32 0.0, %v236
  %v238 = vpop.f32.mrb[0].mxu0
  %239 = vmatprep.mubr.f32.mxu0 %v99
  %240 = vmatmul.mubr.f32.gmra.mrb[0].mxu0 %v98
  %v241 = vpop.f32.mrb[0].mxu0
  %v242 = vadd.f32 0.0, %v241
  %v243 = vpop.f32.mrb[0].mxu0
  %244 = vdwg.mxu0
  %v245 = vadd.f32 %v100, %v207
  %v246 = vadd.f32 %v101, %v212
  %v247 = vadd.f32 %v102, %v217
  %v248 = vadd.f32 %v103, %v222
  %v249 = vadd.f32 %v104, %v227
  %v250 = vadd.f32 %v105, %v232
  %v251 = vadd.f32 %v106, %v237
  %v252 = vadd.f32 %v107, %v242
  %vm253 = vcmask 293888
  %254 = vst.msk [vmem:[#allocation2] sm:$0xff] %vm253, %v245
  %255 = vst.msk [vmem:[#allocation2 + $0x8] sm:$0xff] %vm253, %v246
  %256 = vst.msk [vmem:[#allocation2 + $0x10] sm:$0xff] %vm253, %v247
  %257 = vst.msk [vmem:[#allocation2 + $0x18] sm:$0xff] %vm253, %v248
  %258 = vst.msk [vmem:[#allocation2 + $0x20] sm:$0xff] %vm253, %v249
  %259 = vst.msk [vmem:[#allocation2 + $0x28] sm:$0xff] %vm253, %v250
  %260 = vst.msk [vmem:[#allocation2 + $0x30] sm:$0xff] %vm253, %v251
  %261 = vst.msk [vmem:[#allocation2 + $0x38] sm:$0xff] %vm253, %v252
  // Predicated region
  $region14: #{model_forward.5} parent=0 // pred_check
    %p262 = pneg %p11
  $region15: #{model_forward.5} parent=0 // pred_check_branch
    %264 = sbr.rel (%p262) target = $region17
  $region16: #{model_forward.5} parent=0 // pred_region
    %v265 = vld [vmem:[#allocation2] sm:$0xff]
    %v266 = vld [vmem:[#allocation2 + $0x8] sm:$0xff]
    %v267 = vld [vmem:[#allocation2 + $0x10] sm:$0xff]
    %v268 = vld [vmem:[#allocation2 + $0x18] sm:$0xff]
    %v269 = vld [vmem:[#allocation2 + $0x20] sm:$0xff]
    %v270 = vld [vmem:[#allocation2 + $0x28] sm:$0xff]
    %v271 = vld [vmem:[#allocation2 + $0x30] sm:$0xff]
    %v272 = vld [vmem:[#allocation2 + $0x38] sm:$0xff]
    %v273 = vmax.f32 %v265, 1.0
    %v274 = vmax.f32 %v266, 1.0
    %v275 = vmax.f32 %v267, 1.0
    %v276 = vmax.f32 %v268, 1.0
    %v277 = vmax.f32 %v269, 1.0
    %v278 = vmax.f32 %v270, 1.0
    %v279 = vmax.f32 %v271, 1.0
    %v280 = vmax.f32 %v272, 1.0
    %282 = vset.pattern.permute.xlu0 35
    %283 = vperm.xlu0 %282, %v273
    %v284 = vpop.permute.xlu0 %283
    %287 = vset.pattern.permute.xlu0 35
    %288 = vperm.xlu0 %287, %v274
    %v289 = vpop.permute.xlu0 %288
    %292 = vset.pattern.permute.xlu0 35
    %293 = vperm.xlu0 %292, %v275
    %v294 = vpop.permute.xlu0 %293
    %297 = vset.pattern.permute.xlu0 35
    %298 = vperm.xlu0 %297, %v276
    %v299 = vpop.permute.xlu0 %298
    %302 = vset.pattern.permute.xlu0 35
    %303 = vperm.xlu0 %302, %v277
    %v304 = vpop.permute.xlu0 %303
    %307 = vset.pattern.permute.xlu0 35
    %308 = vperm.xlu0 %307, %v278
    %v309 = vpop.permute.xlu0 %308
    %312 = vset.pattern.permute.xlu0 35
    %313 = vperm.xlu0 %312, %v279
    %v314 = vpop.permute.xlu0 %313
    %317 = vset.pattern.permute.xlu0 35
    %318 = vperm.xlu0 %317, %v280
    %v319 = vpop.permute.xlu0 %318
    %v321 = vrcp.pop %v284
    %v322 = vmul.f32 %v265, %v321
    %v323 = vrcp.pop %v289
    %v324 = vmul.f32 %v266, %v323
    %v325 = vrcp.pop %v294
    %v326 = vmul.f32 %v267, %v325
    %v327 = vrcp.pop %v299
    %v328 = vmul.f32 %v268, %v327
    %v329 = vrcp.pop %v304
    %v330 = vmul.f32 %v269, %v329
    %v331 = vrcp.pop %v309
    %v332 = vmul.f32 %v270, %v331
    %v333 = vrcp.pop %v314
    %v334 = vmul.f32 %v271, %v333
    %v335 = vrcp.pop %v319
    %v336 = vmul.f32 %v272, %v335
    %337 = vst.msk [vmem:[%s2] sm:$0xff] %vm253, %v322
    %338 = vst.msk [vmem:[%s2 + $0x8] sm:$0xff] %vm253, %v324
    %339 = vst.msk [vmem:[%s2 + $0x10] sm:$0xff] %vm253, %v326
    %340 = vst.msk [vmem:[%s2 + $0x18] sm:$0xff] %vm253, %v328
    %341 = vst.msk [vmem:[%s2 + $0x20] sm:$0xff] %vm253, %v330
    %342 = vst.msk [vmem:[%s2 + $0x28] sm:$0xff] %vm253, %v332
    %343 = vst.msk [vmem:[%s2 + $0x30] sm:$0xff] %vm253, %v334
    %344 = vst.msk [vmem:[%s2 + $0x38] sm:$0xff] %vm253, %v336
  $region17: #{model_forward.5} parent=0 // pred_fallthru
    _
  // Predicated region
  $region18: #{model_forward.5} parent=0 // pred_check
    _
  $region19: #{model_forward.5} parent=0 // pred_check_branch
    %346 = sbr.rel (0) target = $region21
  $region20: #{model_forward.5} parent=0 // pred_region
    _
  $region21: #{model_forward.5} parent=0 // pred_fallthru
    _
  // Predicated region
  $region22: #{model_forward.5} parent=0 // pred_check
    _
  $region23: #{model_forward.5} parent=0 // pred_check_branch
    %348 = sbr.rel (0) target = $region25
  $region24: #{model_forward.5} parent=0 // pred_region
    _
  $region25: #{model_forward.5} parent=0 // pred_fallthru
    _

</llo_original>
